<compile_context>
chip_gen: v5e
topology: v5e:2x2
jax: 0.10.0
libtpu: 0.0.40
codegen_flags: <defaults>
</compile_context>

<pallas_src>
import functools

import jax
import jax.numpy as jnp
from jax.experimental import pallas as pl
from jax.experimental.pallas import tpu as pltpu


def _primary_capsule_kernel(a_ref, w_ref, b_ref, red_ref, brd_ref, o_ref):
    # a_ref  : (1, Kc, Nt)  bf16  im2col patches for Bt samples (lane = b*OHW + s)
    # w_ref  : (Cout, Kc)   bf16  flattened conv weight (OIHW row-major)  [resident]
    # b_ref  : (Cout, 1)    f32   bias                                    [resident]
    # red_ref: (Nt, Ng)     bf16  0/1 group-reduce matrix                 [resident]
    # brd_ref: (Ng, Nt)     bf16  0/1 group-broadcast matrix              [resident]
    # o_ref  : (1, Cout, Nt) bf16 squashed conv output, channel-major per sample
    a_t = a_ref[0]                                                 # (Kc, Nt)
    w = w_ref[...]                                                 # (Cout, Kc)

    # Conv as a bf16 MXU matmul with f32 accumulation; bias add on the VPU.
    acc = jnp.dot(w, a_t, preferred_element_type=jnp.float32)     # (Cout, Nt) f32
    acc = acc + b_ref[...]

    # Per-capsule sum of squares: reduce to one lane per capsule, then broadcast
    # back -- two small bf16 matmuls (f32 accumulate) instead of an f32 NxN op.
    sq = (acc * acc).astype(jnp.bfloat16)                          # (Cout, Nt)
    gs = jnp.dot(sq, red_ref[...], preferred_element_type=jnp.float32)   # (Cout, Ng)
    ssq = jnp.dot(gs.astype(jnp.bfloat16), brd_ref[...],
                  preferred_element_type=jnp.float32)              # (Cout, Nt)

    # squash: scale = |v|^2 / (1 + |v|^2) / (|v| + eps), computed from |v|^2 with
    # the reciprocal and rsqrt on the EUP slot.
    scale = ssq * pl.reciprocal(1.0 + ssq, approx=True) * jax.lax.rsqrt(ssq + 1e-16)
    o_ref[0] = (acc * scale).astype(o_ref.dtype)


def primary_capsule_forward(x, weight, bias, num_maps, num_dims, stride=2,
                            batch_tile=None):
    """x: (B, Cin, H, W) NCHW; weight: (Cout, Cin, KH, KW) OIHW; bias: (Cout,)."""
    B, Cin, H, W = x.shape
    Cout, _, KH, KW = weight.shape
    OH = (H - KH) // stride + 1
    OW = (W - KW) // stride + 1
    OHW = OH * OW
    Kc = Cin * KH * KW
    assert Cout == num_maps * num_dims
    # Capsule = num_dims consecutive spatial positions of one channel (matches
    # the module's .view(-1, num_caps, num_dims) on an NCHW conv output); groups
    # never cross sample boundaries because OHW % num_dims == 0.
    assert OHW % num_dims == 0

    # --- batch tile: 32 makes the lane dim (Bt*OHW = 1152) an exact multiple of
    # 128; shrink if the double-buffered im2col block would not fit a portable
    # VMEM budget (v7x has only 64 MiB).  For big B keep >= 4 grid steps so both
    # v7x TensorCores get pipelined work.
    if batch_tile is None:
        Bt = 32
        while Bt > 1 and 2 * (Kc * Bt * OHW * 2) > 24 * 1024 * 1024:
            Bt //= 2
        Bt = min(Bt, B)
    else:
        Bt = min(batch_tile, B)
    Bg = pl.cdiv(B, Bt)
    Bpad = Bg * Bt
    Nt = Bt * OHW
    Ng = Nt // num_dims

    # --- im2col glue (pure data movement) built directly in the batch-folded
    # (Bg, Kc, Bt*OHW) layout the kernel consumes; rows ordered (cin, kh, kw) to
    # match weight.reshape(Cout, Kc). bf16 so the one patch-matrix
    # materialization (and its DMA into VMEM) is half the bytes.
    xb = x.astype(jnp.bfloat16)
    if Bpad != B:
        xb = jnp.pad(xb, ((0, Bpad - B), (0, 0), (0, 0), (0, 0)))
    taps = []
    for kh in range(KH):
        for kw in range(KW):
            t = xb[:, :, kh:kh + stride * OH:stride, kw:kw + stride * OW:stride]
            t = t.reshape(Bg, Bt, Cin, OHW).transpose(0, 2, 1, 3)  # (Bg, Cin, Bt, OHW)
            taps.append(t)
    pat = jnp.stack(taps, axis=2)                  # (Bg, Cin, KH*KW, Bt, OHW)
    a_t = pat.reshape(Bg, Kc, Nt)                  # lane = b_local*OHW + spatial

    w_t = weight.reshape(Cout, Kc).astype(jnp.bfloat16)       # (Cout, Kc)
    b2 = bias.reshape(Cout, 1).astype(jnp.float32)            # (Cout, 1)

    # Constant 0/1 reduce / broadcast matrices for the capsule group sum
    # (precomputed once; constant index_map keeps them VMEM-resident).
    lane = jnp.arange(Nt)
    red = (lane[:, None] // num_dims == jnp.arange(Ng)[None, :]).astype(jnp.bfloat16)
    brd = red.T

    out = pl.pallas_call(
        _primary_capsule_kernel,
        out_shape=jax.ShapeDtypeStruct((Bg, Cout, Nt), jnp.bfloat16),
        grid=(Bg,),
        in_specs=[
            pl.BlockSpec((1, Kc, Nt), lambda g: (g, 0, 0)),
            pl.BlockSpec((Cout, Kc), lambda g: (0, 0)),
            pl.BlockSpec((Cout, 1), lambda g: (0, 0)),
            pl.BlockSpec((Nt, Ng), lambda g: (0, 0)),
            pl.BlockSpec((Ng, Nt), lambda g: (0, 0)),
        ],
        out_specs=pl.BlockSpec((1, Cout, Nt), lambda g: (g, 0, 0)),
        compiler_params=pltpu.CompilerParams(
            dimension_semantics=("parallel",),
        ),
    )(a_t, w_t, b2, red, brd)

    # (Bg, Cout, Bt, OHW) -> per-sample channel-major, then the PyTorch
    # `.view(-1, num_caps, num_dims)` is a pure reshape. Output stays bf16.
    out = out.reshape(Bg, Cout, Bt, OHW).transpose(0, 2, 1, 3)
    out = out.reshape(Bpad, Cout * OHW)[:B]
    num_caps = (Cout * OHW) // num_dims
    return out.reshape(B, num_caps, num_dims)


if __name__ == "__main__":
    # Small config consistent with the module: kernel 9, stride 2, padding 0,
    # 19x19 spatial -> 6x6 output (num_caps = 6*6*num_maps as in __init__).
    # d shrunk 256 -> 16 to keep the example small; num_maps kept at 32.
    B, Cin, H, W = 5, 16, 19, 19
    num_maps, num_dims, K, stride = 32, 4, 9, 2
    Cout = num_maps * num_dims

    key = jax.random.PRNGKey(0)
    k1, k2, k3 = jax.random.split(key, 3)
    x = jax.random.normal(k1, (B, Cin, H, W), jnp.float32)
    fan_in = Cin * K * K
    weight = jax.random.normal(k2, (Cout, Cin, K, K), jnp.float32) / jnp.sqrt(fan_in)
    bias = 0.01 * jax.random.normal(k3, (Cout,), jnp.float32)

    # batch_tile=2 here exercises the multi-step grid + batch-padding path while
    # staying tiny; production default (batch_tile=None) uses Bt=32 (lane-dense).
    fwd = jax.jit(functools.partial(primary_capsule_forward,
                                    num_maps=num_maps, num_dims=num_dims,
                                    stride=stride, batch_tile=2))
    out = jax.block_until_ready(fwd(x, weight, bias))

    # Pure-JAX f32 reference of the PyTorch forward (conv -> view -> squash).
    conv_ref = jax.lax.conv_general_dilated(
        x, weight, (stride, stride), "VALID",
        dimension_numbers=("NCHW", "OIHW", "NCHW"),
    ) + bias[None, :, None, None]
    num_caps = 6 * 6 * num_maps
    caps_ref = conv_ref.reshape(B, num_caps, num_dims)
    norm = jnp.linalg.norm(caps_ref, axis=-1, keepdims=True)
    ref = (norm ** 2 / (1 + norm ** 2) / (norm + 1e-8)) * caps_ref

    assert out.shape == ref.shape == (B, num_caps, num_dims)
    err = float(jnp.max(jnp.abs(out.astype(jnp.float32) - ref)))
    assert err < 5e-2, f"max abs err {err}"
    print("KERNEL_OK")
</pallas_src>

<mosaic_0001>
module attributes {stable_mosaic.version = 11 : i64} {
  func.func @_primary_capsule_kernel(%arg0: i32, %arg1: memref<1x1296x72xbf16, #tpu.memory_space<vmem>>, %arg2: memref<128x1296xbf16, #tpu.memory_space<vmem>>, %arg3: memref<128x1xf32, #tpu.memory_space<vmem>>, %arg4: memref<72x18xbf16, #tpu.memory_space<vmem>>, %arg5: memref<18x72xbf16, #tpu.memory_space<vmem>>, %arg6: memref<1x128x72xbf16, #tpu.memory_space<vmem>>) attributes {dimension_semantics = [#tpu.dimension_semantics<parallel>], iteration_bounds = array<i64: 3>, scalar_prefetch = 0 : i64, scratch_operands = 0 : i64, tpu.core_type = #tpu.core_type<tc>, window_params = [{transform_indices = @transform_0, window_bounds = array<i64: 1, 1296, 72>}, {pipeline_mode = #tpu.pipeline_mode<synchronous>, transform_indices = @transform_1, window_bounds = array<i64: 128, 1296>}, {pipeline_mode = #tpu.pipeline_mode<synchronous>, transform_indices = @transform_2, window_bounds = array<i64: 128, 1>}, {pipeline_mode = #tpu.pipeline_mode<synchronous>, transform_indices = @transform_3, window_bounds = array<i64: 72, 18>}, {pipeline_mode = #tpu.pipeline_mode<synchronous>, transform_indices = @transform_4, window_bounds = array<i64: 18, 72>}, {transform_indices = @transform_5, window_bounds = array<i64: 1, 128, 72>}]} {
    %c0 = arith.constant 0 : index
    %c0_0 = arith.constant 0 : index
    %c0_1 = arith.constant 0 : index
    %0 = vector.load %arg1[%c0, %c0_0, %c0_1] : memref<1x1296x72xbf16, #tpu.memory_space<vmem>>, vector<1x1296x72xbf16>
    %1 = vector.shape_cast %0 : vector<1x1296x72xbf16> to vector<1296x72xbf16>
    %c0_2 = arith.constant 0 : index
    %c0_3 = arith.constant 0 : index
    %2 = vector.load %arg2[%c0_2, %c0_3] : memref<128x1296xbf16, #tpu.memory_space<vmem>>, vector<128x1296xbf16>
    %cst = arith.constant dense<0.000000e+00> : vector<128x72xf32>
    %3 = tpu.matmul %2, %1, %cst {dimension_numbers = #tpu.dot_dimension_numbers<[1], [0], [0], [1], [0, 0, 1, 1], [], []>} : vector<128x1296xbf16>, vector<1296x72xbf16>, vector<128x72xf32> -> vector<128x72xf32>
    %c0_4 = arith.constant 0 : index
    %c0_5 = arith.constant 0 : index
    %4 = vector.load %arg3[%c0_4, %c0_5] : memref<128x1xf32, #tpu.memory_space<vmem>>, vector<128x1xf32>
    %5 = vector.broadcast %4 : vector<128x1xf32> to vector<128x72xf32>
    %6 = arith.addf %3, %5 : vector<128x72xf32>
    %7 = arith.mulf %6, %6 : vector<128x72xf32>
    %8 = arith.truncf %7 : vector<128x72xf32> to vector<128x72xbf16>
    %c0_6 = arith.constant 0 : index
    %c0_7 = arith.constant 0 : index
    %9 = vector.load %arg4[%c0_6, %c0_7] : memref<72x18xbf16, #tpu.memory_space<vmem>>, vector<72x18xbf16>
    %cst_8 = arith.constant dense<0.000000e+00> : vector<128x18xf32>
    %10 = tpu.matmul %8, %9, %cst_8 {dimension_numbers = #tpu.dot_dimension_numbers<[1], [0], [0], [1], [0, 0, 1, 1], [], []>} : vector<128x72xbf16>, vector<72x18xbf16>, vector<128x18xf32> -> vector<128x18xf32>
    %11 = arith.truncf %10 : vector<128x18xf32> to vector<128x18xbf16>
    %c0_9 = arith.constant 0 : index
    %c0_10 = arith.constant 0 : index
    %12 = vector.load %arg5[%c0_9, %c0_10] : memref<18x72xbf16, #tpu.memory_space<vmem>>, vector<18x72xbf16>
    %cst_11 = arith.constant dense<0.000000e+00> : vector<128x72xf32>
    %13 = tpu.matmul %11, %12, %cst_11 {dimension_numbers = #tpu.dot_dimension_numbers<[1], [0], [0], [1], [0, 0, 1, 1], [], []>} : vector<128x18xbf16>, vector<18x72xbf16>, vector<128x72xf32> -> vector<128x72xf32>
    %cst_12 = arith.constant 1.000000e+00 : f32
    %14 = vector.broadcast %cst_12 : f32 to vector<128x72xf32>
    %15 = arith.addf %14, %13 : vector<128x72xf32>
    %16 = tpu.reciprocal %15 {approx = true} : vector<128x72xf32> -> vector<128x72xf32>
    %17 = arith.mulf %13, %16 : vector<128x72xf32>
    %cst_13 = arith.constant 1.000000e-16 : f32
    %18 = vector.broadcast %cst_13 : f32 to vector<128x72xf32>
    %19 = arith.addf %13, %18 : vector<128x72xf32>
    %20 = math.rsqrt %19 : vector<128x72xf32>
    %21 = arith.mulf %17, %20 : vector<128x72xf32>
    %22 = arith.mulf %6, %21 : vector<128x72xf32>
    %23 = arith.truncf %22 : vector<128x72xf32> to vector<128x72xbf16>
    %c0_14 = arith.constant 0 : index
    %c0_15 = arith.constant 0 : index
    %c0_16 = arith.constant 0 : index
    %24 = vector.load %arg6[%c0_14, %c0_15, %c0_16] : memref<1x128x72xbf16, #tpu.memory_space<vmem>>, vector<1x128x72xbf16>
    %25 = vector.shape_cast %24 : vector<1x128x72xbf16> to vector<128x72xbf16>
    %26 = vector.shape_cast %23 : vector<128x72xbf16> to vector<1x128x72xbf16>
    tpu.vector_store %arg6[%c0_14, %c0_15, %c0_16], %26 {strides = array<i32>} : memref<1x128x72xbf16, #tpu.memory_space<vmem>>, vector<1x128x72xbf16>,
    return
  }
  func.func @transform_0(%arg0: i32) -> (i32, i32, i32) {
    %c0_i32 = arith.constant 0 : i32
    %c0_i32_0 = arith.constant 0 : i32
    %c0_i32_1 = arith.constant 0 : i32
    return %arg0, %c0_i32, %c0_i32_0 : i32, i32, i32
  }
  func.func @transform_1(%arg0: i32) -> (i32, i32) {
    %c0_i32 = arith.constant 0 : i32
    %c0_i32_0 = arith.constant 0 : i32
    %c0_i32_1 = arith.constant 0 : i32
    return %c0_i32, %c0_i32_0 : i32, i32
  }
  func.func @transform_2(%arg0: i32) -> (i32, i32) {
    %c0_i32 = arith.constant 0 : i32
    %c0_i32_0 = arith.constant 0 : i32
    %c0_i32_1 = arith.constant 0 : i32
    return %c0_i32, %c0_i32_0 : i32, i32
  }
  func.func @transform_3(%arg0: i32) -> (i32, i32) {
    %c0_i32 = arith.constant 0 : i32
    %c0_i32_0 = arith.constant 0 : i32
    %c0_i32_1 = arith.constant 0 : i32
    return %c0_i32, %c0_i32_0 : i32, i32
  }
  func.func @transform_4(%arg0: i32) -> (i32, i32) {
    %c0_i32 = arith.constant 0 : i32
    %c0_i32_0 = arith.constant 0 : i32
    %c0_i32_1 = arith.constant 0 : i32
    return %c0_i32, %c0_i32_0 : i32, i32
  }
  func.func @transform_5(%arg0: i32) -> (i32, i32, i32) {
    %c0_i32 = arith.constant 0 : i32
    %c0_i32_0 = arith.constant 0 : i32
    %c0_i32_1 = arith.constant 0 : i32
    return %arg0, %c0_i32, %c0_i32_0 : i32, i32, i32
  }
}

</mosaic_0001>

<llo_original>
// kernel: primary_capsule_forward.1
$region0: #{primary_capsule_forward.1}
  #allocation0 [shape = 'u32[]', space=smem, size = 0x4, offset = 0x4, fixed_abs, tag = 'smem constant byte address 0x4 - core index']
  #allocation1 [shape = 'u32[72,128]{1,0:T(1,128)}', space=vmem, size = 0x9000, scoped, tag = 'internal scratch']
  %s0 = inlined_call_operand.vmem [shape: bf16[3,1296,72], index: 0, kind: input, shape index: {}]
  %s1 = inlined_call_operand.vmem [shape: bf16[128,1296], index: 1, kind: input, shape index: {}]
  %s2 = inlined_call_operand.vmem [shape: f32[128,1], index: 2, kind: input, shape index: {}]
  %s3 = inlined_call_operand.vmem [shape: bf16[72,18], index: 3, kind: input, shape index: {}]
  %s4 = inlined_call_operand.vmem [shape: bf16[18,72], index: 4, kind: input, shape index: {}]
  %s5 = inlined_call_operand.vmem [shape: bf16[3,128,72], index: 5, kind: output, shape index: {}]
  %s6 = sld [smem:[#allocation0]]
  $region53: #{primary_capsule_forward.1} parent=0
    _
  %s8 = ssub.s32 1, %s6
  %s9 = scalar_select 0, %s8, %s6
  loop: start=0, step=1, limit=5
  $region2: #{primary_capsule_forward.1} parent=0 // loop_pre_header
    _
  $region3: #{primary_capsule_forward.1} parent=0 // loop_header
    %s11 = sphi 0, %s15
    %p12 = scmp.ge.s32.totalorder %s11, 5
    %s21 = sphi 0, %s23
    %s24 = sphi 0, %s21
    %s25 = sphi 0, %s24
    %s41 = sphi 0, %s25
    %s45 = sphi 0, %s45
    %s47 = sphi 0, %s45
    %s48 = sphi 0, %s47
    %s62 = sphi 0, %s48
    %s66 = sphi 0, %s66
    %s68 = sphi 0, %s66
    %s69 = sphi 0, %s68
    %s83 = sphi 0, %s69
    %s87 = sphi 0, %s87
    %s89 = sphi 0, %s87
    %s90 = sphi 0, %s89
    %s104 = sphi 0, %s90
    %s108 = sphi 0, %s108
    %s110 = sphi 0, %s108
    %s111 = sphi 0, %s110
    %s125 = sphi 0, %s111
    %s131 = sphi 0, %s133
    %s134 = sphi 0, %s131
    %s135 = sphi 0, %s134
    %s151 = sphi 0, %s135
  $region4: #{primary_capsule_forward.1} parent=0 // loop_header_branch
    %14 = sbr.rel (%p12) target = $region8
  $region5: #{primary_capsule_forward.1} parent=0 // loop_body
    %s16 = ssub.s32 %s11, 1
    %s17 = ssub.s32 %s11, 2
    %s18 = sadd.s32 %s11, 1
    %s19 = ssub.s32 %s11, %s18
    %p20 = scmp.eq.s32.totalorder %s19, 0
    %s22 = sadd.s32 %s21, 1
    %s23 = scalar_select %p20, %s21, %s22
    %p26 = pneg %p20
    %p27 = scmp.eq.s32.totalorder %s11, 2
    %p28 = por %p26, %p27
    %p29 = scmp.ne.s32.totalorder %s21, %s24
    %p30 = scmp.eq.s32.totalorder %s11, 0
    %p31 = por %p29, %p30
    %p32 = scmp.ne.s32.totalorder %s21, %s24
    %p33 = scmp.eq.s32.totalorder %s16, 2
    %p34 = por %p32, %p33
    %p35 = scmp.ne.s32.totalorder %s24, %s25
    %p36 = scmp.eq.s32.totalorder %s16, 0
    %p37 = por %p35, %p36
    %p38 = scmp.ne.s32.totalorder %s24, %s25
    %p39 = scmp.eq.s32.totalorder %s17, 2
    %p40 = por %p38, %p39
    %p42 = scmp.ne.s32.totalorder %s25, %s41
    %p43 = scmp.eq.s32.totalorder %s17, 0
    %p44 = por %p42, %p43
    %s46 = sadd.s32 %s45, 1
    %p49 = scmp.eq.s32.totalorder %s11, 2
    %p50 = scmp.ne.s32.totalorder %s45, %s47
    %p51 = scmp.eq.s32.totalorder %s11, 0
    %p52 = por %p50, %p51
    %p53 = scmp.ne.s32.totalorder %s45, %s47
    %p54 = scmp.eq.s32.totalorder %s16, 2
    %p55 = por %p53, %p54
    %p56 = scmp.ne.s32.totalorder %s47, %s48
    %p57 = scmp.eq.s32.totalorder %s16, 0
    %p58 = por %p56, %p57
    %p59 = scmp.ne.s32.totalorder %s47, %s48
    %p60 = scmp.eq.s32.totalorder %s17, 2
    %p61 = por %p59, %p60
    %p63 = scmp.ne.s32.totalorder %s48, %s62
    %p64 = scmp.eq.s32.totalorder %s17, 0
    %p65 = por %p63, %p64
    %s67 = sadd.s32 %s66, 1
    %p70 = scmp.eq.s32.totalorder %s11, 2
    %p71 = scmp.ne.s32.totalorder %s66, %s68
    %p72 = scmp.eq.s32.totalorder %s11, 0
    %p73 = por %p71, %p72
    %p74 = scmp.ne.s32.totalorder %s66, %s68
    %p75 = scmp.eq.s32.totalorder %s16, 2
    %p76 = por %p74, %p75
    %p77 = scmp.ne.s32.totalorder %s68, %s69
    %p78 = scmp.eq.s32.totalorder %s16, 0
    %p79 = por %p77, %p78
    %p80 = scmp.ne.s32.totalorder %s68, %s69
    %p81 = scmp.eq.s32.totalorder %s17, 2
    %p82 = por %p80, %p81
    %p84 = scmp.ne.s32.totalorder %s69, %s83
    %p85 = scmp.eq.s32.totalorder %s17, 0
    %p86 = por %p84, %p85
    %s88 = sadd.s32 %s87, 1
    %p91 = scmp.eq.s32.totalorder %s11, 2
    %p92 = scmp.ne.s32.totalorder %s87, %s89
    %p93 = scmp.eq.s32.totalorder %s11, 0
    %p94 = por %p92, %p93
    %p95 = scmp.ne.s32.totalorder %s87, %s89
    %p96 = scmp.eq.s32.totalorder %s16, 2
    %p97 = por %p95, %p96
    %p98 = scmp.ne.s32.totalorder %s89, %s90
    %p99 = scmp.eq.s32.totalorder %s16, 0
    %p100 = por %p98, %p99
    %p101 = scmp.ne.s32.totalorder %s89, %s90
    %p102 = scmp.eq.s32.totalorder %s17, 2
    %p103 = por %p101, %p102
    %p105 = scmp.ne.s32.totalorder %s90, %s104
    %p106 = scmp.eq.s32.totalorder %s17, 0
    %p107 = por %p105, %p106
    %s109 = sadd.s32 %s108, 1
    %p112 = scmp.eq.s32.totalorder %s11, 2
    %p113 = scmp.ne.s32.totalorder %s108, %s110
    %p114 = scmp.eq.s32.totalorder %s11, 0
    %p115 = por %p113, %p114
    %p116 = scmp.ne.s32.totalorder %s108, %s110
    %p117 = scmp.eq.s32.totalorder %s16, 2
    %p118 = por %p116, %p117
    %p119 = scmp.ne.s32.totalorder %s110, %s111
    %p120 = scmp.eq.s32.totalorder %s16, 0
    %p121 = por %p119, %p120
    %p122 = scmp.ne.s32.totalorder %s110, %s111
    %p123 = scmp.eq.s32.totalorder %s17, 2
    %p124 = por %p122, %p123
    %p126 = scmp.ne.s32.totalorder %s111, %s125
    %p127 = scmp.eq.s32.totalorder %s17, 0
    %p128 = por %p126, %p127
    %s129 = ssub.s32 %s11, %s18
    %p130 = scmp.eq.s32.totalorder %s129, 0
    %s132 = sadd.s32 %s131, 1
    %s133 = scalar_select %p130, %s131, %s132
    %p136 = pneg %p130
    %p137 = scmp.eq.s32.totalorder %s11, 2
    %p138 = por %p136, %p137
    %p139 = scmp.ne.s32.totalorder %s131, %s134
    %p140 = scmp.eq.s32.totalorder %s11, 0
    %p141 = por %p139, %p140
    %p142 = scmp.ne.s32.totalorder %s131, %s134
    %p143 = scmp.eq.s32.totalorder %s16, 2
    %p144 = por %p142, %p143
    %p145 = scmp.ne.s32.totalorder %s134, %s135
    %p146 = scmp.eq.s32.totalorder %s16, 0
    %p147 = por %p145, %p146
    %p148 = scmp.ne.s32.totalorder %s134, %s135
    %p149 = scmp.eq.s32.totalorder %s17, 2
    %p150 = por %p148, %p149
    %p152 = scmp.ne.s32.totalorder %s135, %s151
    %p153 = scmp.eq.s32.totalorder %s17, 0
    %p154 = por %p152, %p153
    %p155 = scmp.le.s32.totalorder 1, %s11
    %p156 = scmp.lt.s32.totalorder %s11, 4
    %p157 = pnand %p155, %p156
    %p158 = pneg %p157
    // Predicated region
    $region9: #{primary_capsule_forward.1} parent=5 // pred_check
      _
    $region10: #{primary_capsule_forward.1} parent=5 // pred_check_branch
      %160 = sbr.rel (%p157) target = $region12
    $region11: #{primary_capsule_forward.1} parent=5 // pred_region
      %s161 = ssub.s32 %s11, 1
      // Predicated region
      $region13: #{primary_capsule_forward.1} parent=11 // pred_check
        %p162 = pneg %p58
      $region14: #{primary_capsule_forward.1} parent=11 // pred_check_branch
        %164 = sbr.rel (%p162) target = $region16
      $region15: #{primary_capsule_forward.1} parent=11 // pred_region
        _
      $region16: #{primary_capsule_forward.1} parent=11 // pred_fallthru
        _
      // Predicated region
      $region17: #{primary_capsule_forward.1} parent=11 // pred_check
        %p165 = pneg %p79
      $region18: #{primary_capsule_forward.1} parent=11 // pred_check_branch
        %167 = sbr.rel (%p165) target = $region20
      $region19: #{primary_capsule_forward.1} parent=11 // pred_region
        _
      $region20: #{primary_capsule_forward.1} parent=11 // pred_fallthru
        _
      // Predicated region
      $region21: #{primary_capsule_forward.1} parent=11 // pred_check
        %p168 = pneg %p100
      $region22: #{primary_capsule_forward.1} parent=11 // pred_check_branch
        %170 = sbr.rel (%p168) target = $region24
      $region23: #{primary_capsule_forward.1} parent=11 // pred_region
        _
      $region24: #{primary_capsule_forward.1} parent=11 // pred_fallthru
        _
      // Predicated region
      $region25: #{primary_capsule_forward.1} parent=11 // pred_check
        %p171 = pneg %p121
      $region26: #{primary_capsule_forward.1} parent=11 // pred_check_branch
        %173 = sbr.rel (%p171) target = $region28
      $region27: #{primary_capsule_forward.1} parent=11 // pred_region
        _
      $region28: #{primary_capsule_forward.1} parent=11 // pred_fallthru
        _
    $region12: #{primary_capsule_forward.1} parent=5 // pred_fallthru
      _
    %p174 = scmp.lt.s32.totalorder %s11, 3
    // Predicated region
    $region29: #{primary_capsule_forward.1} parent=5 // pred_check
      %p175 = pneg %p174
    $region30: #{primary_capsule_forward.1} parent=5 // pred_check_branch
      %177 = sbr.rel (%p175) target = $region32
    $region31: #{primary_capsule_forward.1} parent=5 // pred_region
      // Predicated region
      $region33: #{primary_capsule_forward.1} parent=31 // pred_check
        %p178 = pneg %p31
      $region34: #{primary_capsule_forward.1} parent=31 // pred_check_branch
        %180 = sbr.rel (%p178) target = $region36
      $region35: #{primary_capsule_forward.1} parent=31 // pred_region
        %p181 = scmp.lt.s32.totalorder %s11, 2
        %s182 = scalar_select %p181, %s11, 2
        %s183 = smul.addr %s182, 162
        %s184 = smul.addr %s183, 4
        %s185 = scalar_lea.vmem %s0, %s184
      $region36: #{primary_capsule_forward.1} parent=31 // pred_fallthru
        _
    $region32: #{primary_capsule_forward.1} parent=5 // pred_fallthru
      _
    %p186 = scmp.le.s32.totalorder 1, %s11
    %p187 = scmp.lt.s32.totalorder %s11, 4
    %p188 = pnand %p186, %p187
    %p189 = pneg %p188
    // Predicated region
    $region37: #{primary_capsule_forward.1} parent=5 // pred_check
      _
    $region38: #{primary_capsule_forward.1} parent=5 // pred_check_branch
      %191 = sbr.rel (%p188) target = $region40
    $region39: #{primary_capsule_forward.1} parent=5 // pred_region
      %s192 = ssub.s32 %s11, 1
      %p193 = scmp.lt.s32.totalorder %s16, 2
      %s194 = scalar_select %p193, %s16, 2
      %s195 = smul.addr %s194, 162
      %s196 = smul.addr %s195, 4
      %s197 = scalar_lea.vmem %s0, %s196
      %p198 = pneg %p37
      %p199 = pneg %p34
      %p200 = pneg %p58
      %p201 = pneg %p55
      %p202 = pneg %p79
      %p203 = pneg %p76
      %p204 = pneg %p100
      %p205 = pneg %p97
      %p206 = pneg %p121
      %p207 = pneg %p118
      %p208 = pneg %p147
      %p209 = pneg %p144
      %p210 = scmp.lt.s32.totalorder %s16, 2
      %s211 = scalar_select %p210, %s16, 2
      %s212 = smul.addr %s211, 16
      %s213 = smul.addr %s212, 4
      %s214 = scalar_lea.vmem %s5, %s213
      %p215 = scmp.lt.s32.totalorder %s16, 2
      %s216 = scalar_select %p215, %s16, 2
      %s217 = smul.addr %s216, 162
      %s218 = smul.addr %s217, 4
      %s219 = scalar_lea.vmem %s0, %s218
      %p220 = scmp.lt.s32.totalorder %s16, 2
      %s221 = scalar_select %p220, %s16, 2
      %s222 = smul.addr %s221, 16
      %s223 = smul.addr %s222, 4
      %s224 = scalar_lea.vmem %s5, %s223
      %v226 = vld [vmem:[%s219] sm:$0xf]
      %v227 = vld [vmem:[%s219 + $0x4] sm:$0xf]
      %v228 = vld [vmem:[%s219 + $0x8] sm:$0xf]
      %v229 = vld [vmem:[%s219 + $0xc] sm:$0xf]
      %v230 = vld [vmem:[%s219 + $0x10] sm:$0xf]
      %v231 = vld [vmem:[%s219 + $0x14] sm:$0xf]
      %v232 = vld [vmem:[%s219 + $0x18] sm:$0xf]
      %v233 = vld [vmem:[%s219 + $0x1c] sm:$0xf]
      %v234 = vld [vmem:[%s219 + $0x20] sm:$0xf]
      %v235 = vld [vmem:[%s219 + $0x24] sm:$0xf]
      %v236 = vld [vmem:[%s219 + $0x28] sm:$0xf]
      %v237 = vld [vmem:[%s219 + $0x2c] sm:$0xf]
      %v238 = vld [vmem:[%s219 + $0x30] sm:$0xf]
      %v239 = vld [vmem:[%s219 + $0x34] sm:$0xf]
      %v240 = vld [vmem:[%s219 + $0x38] sm:$0xf]
      %v241 = vld [vmem:[%s219 + $0x3c] sm:$0xf]
      %v242 = vld [vmem:[%s219 + $0x40] sm:$0xf]
      %v243 = vld [vmem:[%s219 + $0x44] sm:$0xf]
      %v244 = vld [vmem:[%s219 + $0x48] sm:$0xf]
      %v245 = vld [vmem:[%s219 + $0x4c] sm:$0xf]
      %v246 = vld [vmem:[%s219 + $0x50] sm:$0xf]
      %v247 = vld [vmem:[%s219 + $0x54] sm:$0xf]
      %v248 = vld [vmem:[%s219 + $0x58] sm:$0xf]
      %v249 = vld [vmem:[%s219 + $0x5c] sm:$0xf]
      %v250 = vld [vmem:[%s219 + $0x60] sm:$0xf]
      %v251 = vld [vmem:[%s219 + $0x64] sm:$0xf]
      %v252 = vld [vmem:[%s219 + $0x68] sm:$0xf]
      %v253 = vld [vmem:[%s219 + $0x6c] sm:$0xf]
      %v254 = vld [vmem:[%s219 + $0x70] sm:$0xf]
      %v255 = vld [vmem:[%s219 + $0x74] sm:$0xf]
      %v256 = vld [vmem:[%s219 + $0x78] sm:$0xf]
      %v257 = vld [vmem:[%s219 + $0x7c] sm:$0xf]
      %v258 = vld [vmem:[%s219 + $0x80] sm:$0xf]
      %v259 = vld [vmem:[%s219 + $0x84] sm:$0xf]
      %v260 = vld [vmem:[%s219 + $0x88] sm:$0xf]
      %v261 = vld [vmem:[%s219 + $0x8c] sm:$0xf]
      %v262 = vld [vmem:[%s219 + $0x90] sm:$0xf]
      %v263 = vld [vmem:[%s219 + $0x94] sm:$0xf]
      %v264 = vld [vmem:[%s219 + $0x98] sm:$0xf]
      %v265 = vld [vmem:[%s219 + $0x9c] sm:$0xf]
      %v266 = vld [vmem:[%s219 + $0xa0] sm:$0xf]
      %v267 = vld [vmem:[%s219 + $0xa4] sm:$0xf]
      %v268 = vld [vmem:[%s219 + $0xa8] sm:$0xf]
      %v269 = vld [vmem:[%s219 + $0xac] sm:$0xf]
      %v270 = vld [vmem:[%s219 + $0xb0] sm:$0xf]
      %v271 = vld [vmem:[%s219 + $0xb4] sm:$0xf]
      %v272 = vld [vmem:[%s219 + $0xb8] sm:$0xf]
      %v273 = vld [vmem:[%s219 + $0xbc] sm:$0xf]
      %v274 = vld [vmem:[%s219 + $0xc0] sm:$0xf]
      %v275 = vld [vmem:[%s219 + $0xc4] sm:$0xf]
      %v276 = vld [vmem:[%s219 + $0xc8] sm:$0xf]
      %v277 = vld [vmem:[%s219 + $0xcc] sm:$0xf]
      %v278 = vld [vmem:[%s219 + $0xd0] sm:$0xf]
      %v279 = vld [vmem:[%s219 + $0xd4] sm:$0xf]
      %v280 = vld [vmem:[%s219 + $0xd8] sm:$0xf]
      %v281 = vld [vmem:[%s219 + $0xdc] sm:$0xf]
      %v282 = vld [vmem:[%s219 + $0xe0] sm:$0xf]
      %v283 = vld [vmem:[%s219 + $0xe4] sm:$0xf]
      %v284 = vld [vmem:[%s219 + $0xe8] sm:$0xf]
      %v285 = vld [vmem:[%s219 + $0xec] sm:$0xf]
      %v286 = vld [vmem:[%s219 + $0xf0] sm:$0xf]
      %v287 = vld [vmem:[%s219 + $0xf4] sm:$0xf]
      %v288 = vld [vmem:[%s219 + $0xf8] sm:$0xf]
      %v289 = vld [vmem:[%s219 + $0xfc] sm:$0xf]
      %v290 = vld [vmem:[%s219 + $0x100] sm:$0xf]
      %v291 = vld [vmem:[%s219 + $0x104] sm:$0xf]
      %v292 = vld [vmem:[%s219 + $0x108] sm:$0xf]
      %v293 = vld [vmem:[%s219 + $0x10c] sm:$0xf]
      %v294 = vld [vmem:[%s219 + $0x110] sm:$0xf]
      %v295 = vld [vmem:[%s219 + $0x114] sm:$0xf]
      %v296 = vld [vmem:[%s219 + $0x118] sm:$0xf]
      %v297 = vld [vmem:[%s219 + $0x11c] sm:$0xf]
      %v298 = vld [vmem:[%s219 + $0x120] sm:$0xf]
      %v299 = vld [vmem:[%s219 + $0x124] sm:$0xf]
      %v300 = vld [vmem:[%s219 + $0x128] sm:$0xf]
      %v301 = vld [vmem:[%s219 + $0x12c] sm:$0xf]
      %v302 = vld [vmem:[%s219 + $0x130] sm:$0xf]
      %v303 = vld [vmem:[%s219 + $0x134] sm:$0xf]
      %v304 = vld [vmem:[%s219 + $0x138] sm:$0xf]
      %v305 = vld [vmem:[%s219 + $0x13c] sm:$0xf]
      %v306 = vld [vmem:[%s219 + $0x140] sm:$0xf]
      %v307 = vld [vmem:[%s219 + $0x144] sm:$0xf]
      %v308 = vld [vmem:[%s219 + $0x148] sm:$0xf]
      %v309 = vld [vmem:[%s219 + $0x14c] sm:$0xf]
      %v310 = vld [vmem:[%s219 + $0x150] sm:$0xf]
      %v311 = vld [vmem:[%s219 + $0x154] sm:$0xf]
      %v312 = vld [vmem:[%s219 + $0x158] sm:$0xf]
      %v313 = vld [vmem:[%s219 + $0x15c] sm:$0xf]
      %v314 = vld [vmem:[%s219 + $0x160] sm:$0xf]
      %v315 = vld [vmem:[%s219 + $0x164] sm:$0xf]
      %v316 = vld [vmem:[%s219 + $0x168] sm:$0xf]
      %v317 = vld [vmem:[%s219 + $0x16c] sm:$0xf]
      %v318 = vld [vmem:[%s219 + $0x170] sm:$0xf]
      %v319 = vld [vmem:[%s219 + $0x174] sm:$0xf]
      %v320 = vld [vmem:[%s219 + $0x178] sm:$0xf]
      %v321 = vld [vmem:[%s219 + $0x17c] sm:$0xf]
      %v322 = vld [vmem:[%s219 + $0x180] sm:$0xf]
      %v323 = vld [vmem:[%s219 + $0x184] sm:$0xf]
      %v324 = vld [vmem:[%s219 + $0x188] sm:$0xf]
      %v325 = vld [vmem:[%s219 + $0x18c] sm:$0xf]
      %v326 = vld [vmem:[%s219 + $0x190] sm:$0xf]
      %v327 = vld [vmem:[%s219 + $0x194] sm:$0xf]
      %v328 = vld [vmem:[%s219 + $0x198] sm:$0xf]
      %v329 = vld [vmem:[%s219 + $0x19c] sm:$0xf]
      %v330 = vld [vmem:[%s219 + $0x1a0] sm:$0xf]
      %v331 = vld [vmem:[%s219 + $0x1a4] sm:$0xf]
      %v332 = vld [vmem:[%s219 + $0x1a8] sm:$0xf]
      %v333 = vld [vmem:[%s219 + $0x1ac] sm:$0xf]
      %v334 = vld [vmem:[%s219 + $0x1b0] sm:$0xf]
      %v335 = vld [vmem:[%s219 + $0x1b4] sm:$0xf]
      %v336 = vld [vmem:[%s219 + $0x1b8] sm:$0xf]
      %v337 = vld [vmem:[%s219 + $0x1bc] sm:$0xf]
      %v338 = vld [vmem:[%s219 + $0x1c0] sm:$0xf]
      %v339 = vld [vmem:[%s219 + $0x1c4] sm:$0xf]
      %v340 = vld [vmem:[%s219 + $0x1c8] sm:$0xf]
      %v341 = vld [vmem:[%s219 + $0x1cc] sm:$0xf]
      %v342 = vld [vmem:[%s219 + $0x1d0] sm:$0xf]
      %v343 = vld [vmem:[%s219 + $0x1d4] sm:$0xf]
      %v344 = vld [vmem:[%s219 + $0x1d8] sm:$0xf]
      %v345 = vld [vmem:[%s219 + $0x1dc] sm:$0xf]
      %v346 = vld [vmem:[%s219 + $0x1e0] sm:$0xf]
      %v347 = vld [vmem:[%s219 + $0x1e4] sm:$0xf]
      %v348 = vld [vmem:[%s219 + $0x1e8] sm:$0xf]
      %v349 = vld [vmem:[%s219 + $0x1ec] sm:$0xf]
      %v350 = vld [vmem:[%s219 + $0x1f0] sm:$0xf]
      %v351 = vld [vmem:[%s219 + $0x1f4] sm:$0xf]
      %v352 = vld [vmem:[%s219 + $0x1f8] sm:$0xf]
      %v353 = vld [vmem:[%s219 + $0x1fc] sm:$0xf]
      %v354 = vld [vmem:[%s219 + $0x200] sm:$0xf]
      %v355 = vld [vmem:[%s219 + $0x204] sm:$0xf]
      %v356 = vld [vmem:[%s219 + $0x208] sm:$0xf]
      %v357 = vld [vmem:[%s219 + $0x20c] sm:$0xf]
      %v358 = vld [vmem:[%s219 + $0x210] sm:$0xf]
      %v359 = vld [vmem:[%s219 + $0x214] sm:$0xf]
      %v360 = vld [vmem:[%s219 + $0x218] sm:$0xf]
      %v361 = vld [vmem:[%s219 + $0x21c] sm:$0xf]
      %v362 = vld [vmem:[%s219 + $0x220] sm:$0xf]
      %v363 = vld [vmem:[%s219 + $0x224] sm:$0xf]
      %v364 = vld [vmem:[%s219 + $0x228] sm:$0xf]
      %v365 = vld [vmem:[%s219 + $0x22c] sm:$0xf]
      %v366 = vld [vmem:[%s219 + $0x230] sm:$0xf]
      %v367 = vld [vmem:[%s219 + $0x234] sm:$0xf]
      %v368 = vld [vmem:[%s219 + $0x238] sm:$0xf]
      %v369 = vld [vmem:[%s219 + $0x23c] sm:$0xf]
      %v370 = vld [vmem:[%s219 + $0x240] sm:$0xf]
      %v371 = vld [vmem:[%s219 + $0x244] sm:$0xf]
      %v372 = vld [vmem:[%s219 + $0x248] sm:$0xf]
      %v373 = vld [vmem:[%s219 + $0x24c] sm:$0xf]
      %v374 = vld [vmem:[%s219 + $0x250] sm:$0xf]
      %v375 = vld [vmem:[%s219 + $0x254] sm:$0xf]
      %v376 = vld [vmem:[%s219 + $0x258] sm:$0xf]
      %v377 = vld [vmem:[%s219 + $0x25c] sm:$0xf]
      %v378 = vld [vmem:[%s219 + $0x260] sm:$0xf]
      %v379 = vld [vmem:[%s219 + $0x264] sm:$0xf]
      %v380 = vld [vmem:[%s219 + $0x268] sm:$0xf]
      %v381 = vld [vmem:[%s219 + $0x26c] sm:$0xf]
      %v382 = vld [vmem:[%s219 + $0x270] sm:$0xf]
      %v383 = vld [vmem:[%s219 + $0x274] sm:$0xf]
      %v384 = vld [vmem:[%s219 + $0x278] sm:$0xf]
      %v385 = vld [vmem:[%s219 + $0x27c] sm:$0xf]
      %v386 = vld [vmem:[%s219 + $0x280] sm:$0xf]
      %v387 = vld [vmem:[%s219 + $0x284] sm:$0xf]
      %v388 = vld [vmem:[%s1] sm:$0xff]
      %v389 = vld [vmem:[%s1 + $0x8] sm:$0xff]
      %v390 = vld [vmem:[%s1 + $0x10] sm:$0xff]
      %v391 = vld [vmem:[%s1 + $0x18] sm:$0xff]
      %v392 = vld [vmem:[%s1 + $0x20] sm:$0xff]
      %v393 = vld [vmem:[%s1 + $0x28] sm:$0xf]
      %v394 = vld [vmem:[%s1 + $0x2c] sm:$0xff]
      %v395 = vld [vmem:[%s1 + $0x34] sm:$0xff]
      %v396 = vld [vmem:[%s1 + $0x3c] sm:$0xff]
      %v397 = vld [vmem:[%s1 + $0x44] sm:$0xff]
      %v398 = vld [vmem:[%s1 + $0x4c] sm:$0xff]
      %v399 = vld [vmem:[%s1 + $0x54] sm:$0xf]
      %v400 = vld [vmem:[%s1 + $0x58] sm:$0xff]
      %v401 = vld [vmem:[%s1 + $0x60] sm:$0xff]
      %v402 = vld [vmem:[%s1 + $0x68] sm:$0xff]
      %v403 = vld [vmem:[%s1 + $0x70] sm:$0xff]
      %v404 = vld [vmem:[%s1 + $0x78] sm:$0xff]
      %v405 = vld [vmem:[%s1 + $0x80] sm:$0xf]
      %v406 = vld [vmem:[%s1 + $0x84] sm:$0xff]
      %v407 = vld [vmem:[%s1 + $0x8c] sm:$0xff]
      %v408 = vld [vmem:[%s1 + $0x94] sm:$0xff]
      %v409 = vld [vmem:[%s1 + $0x9c] sm:$0xff]
      %v410 = vld [vmem:[%s1 + $0xa4] sm:$0xff]
      %v411 = vld [vmem:[%s1 + $0xac] sm:$0xf]
      %v412 = vld [vmem:[%s1 + $0xb0] sm:$0xff]
      %v413 = vld [vmem:[%s1 + $0xb8] sm:$0xff]
      %v414 = vld [vmem:[%s1 + $0xc0] sm:$0xff]
      %v415 = vld [vmem:[%s1 + $0xc8] sm:$0xff]
      %v416 = vld [vmem:[%s1 + $0xd0] sm:$0xff]
      %v417 = vld [vmem:[%s1 + $0xd8] sm:$0xf]
      %v418 = vld [vmem:[%s1 + $0xdc] sm:$0xff]
      %v419 = vld [vmem:[%s1 + $0xe4] sm:$0xff]
      %v420 = vld [vmem:[%s1 + $0xec] sm:$0xff]
      %v421 = vld [vmem:[%s1 + $0xf4] sm:$0xff]
      %v422 = vld [vmem:[%s1 + $0xfc] sm:$0xff]
      %v423 = vld [vmem:[%s1 + $0x104] sm:$0xf]
      %v424 = vld [vmem:[%s1 + $0x108] sm:$0xff]
      %v425 = vld [vmem:[%s1 + $0x110] sm:$0xff]
      %v426 = vld [vmem:[%s1 + $0x118] sm:$0xff]
      %v427 = vld [vmem:[%s1 + $0x120] sm:$0xff]
      %v428 = vld [vmem:[%s1 + $0x128] sm:$0xff]
      %v429 = vld [vmem:[%s1 + $0x130] sm:$0xf]
      %v430 = vld [vmem:[%s1 + $0x134] sm:$0xff]
      %v431 = vld [vmem:[%s1 + $0x13c] sm:$0xff]
      %v432 = vld [vmem:[%s1 + $0x144] sm:$0xff]
      %v433 = vld [vmem:[%s1 + $0x14c] sm:$0xff]
      %v434 = vld [vmem:[%s1 + $0x154] sm:$0xff]
      %v435 = vld [vmem:[%s1 + $0x15c] sm:$0xf]
      %v436 = vld [vmem:[%s1 + $0x160] sm:$0xff]
      %v437 = vld [vmem:[%s1 + $0x168] sm:$0xff]
      %v438 = vld [vmem:[%s1 + $0x170] sm:$0xff]
      %v439 = vld [vmem:[%s1 + $0x178] sm:$0xff]
      %v440 = vld [vmem:[%s1 + $0x180] sm:$0xff]
      %v441 = vld [vmem:[%s1 + $0x188] sm:$0xf]
      %v442 = vld [vmem:[%s1 + $0x18c] sm:$0xff]
      %v443 = vld [vmem:[%s1 + $0x194] sm:$0xff]
      %v444 = vld [vmem:[%s1 + $0x19c] sm:$0xff]
      %v445 = vld [vmem:[%s1 + $0x1a4] sm:$0xff]
      %v446 = vld [vmem:[%s1 + $0x1ac] sm:$0xff]
      %v447 = vld [vmem:[%s1 + $0x1b4] sm:$0xf]
      %v448 = vld [vmem:[%s1 + $0x1b8] sm:$0xff]
      %v449 = vld [vmem:[%s1 + $0x1c0] sm:$0xff]
      %v450 = vld [vmem:[%s1 + $0x1c8] sm:$0xff]
      %v451 = vld [vmem:[%s1 + $0x1d0] sm:$0xff]
      %v452 = vld [vmem:[%s1 + $0x1d8] sm:$0xff]
      %v453 = vld [vmem:[%s1 + $0x1e0] sm:$0xf]
      %v454 = vld [vmem:[%s1 + $0x1e4] sm:$0xff]
      %v455 = vld [vmem:[%s1 + $0x1ec] sm:$0xff]
      %v456 = vld [vmem:[%s1 + $0x1f4] sm:$0xff]
      %v457 = vld [vmem:[%s1 + $0x1fc] sm:$0xff]
      %v458 = vld [vmem:[%s1 + $0x204] sm:$0xff]
      %v459 = vld [vmem:[%s1 + $0x20c] sm:$0xf]
      %v460 = vld [vmem:[%s1 + $0x210] sm:$0xff]
      %v461 = vld [vmem:[%s1 + $0x218] sm:$0xff]
      %v462 = vld [vmem:[%s1 + $0x220] sm:$0xff]
      %v463 = vld [vmem:[%s1 + $0x228] sm:$0xff]
      %v464 = vld [vmem:[%s1 + $0x230] sm:$0xff]
      %v465 = vld [vmem:[%s1 + $0x238] sm:$0xf]
      %v466 = vld [vmem:[%s1 + $0x23c] sm:$0xff]
      %v467 = vld [vmem:[%s1 + $0x244] sm:$0xff]
      %v468 = vld [vmem:[%s1 + $0x24c] sm:$0xff]
      %v469 = vld [vmem:[%s1 + $0x254] sm:$0xff]
      %v470 = vld [vmem:[%s1 + $0x25c] sm:$0xff]
      %v471 = vld [vmem:[%s1 + $0x264] sm:$0xf]
      %v472 = vld [vmem:[%s1 + $0x268] sm:$0xff]
      %v473 = vld [vmem:[%s1 + $0x270] sm:$0xff]
      %v474 = vld [vmem:[%s1 + $0x278] sm:$0xff]
      %v475 = vld [vmem:[%s1 + $0x280] sm:$0xff]
      %v476 = vld [vmem:[%s1 + $0x288] sm:$0xff]
      %v477 = vld [vmem:[%s1 + $0x290] sm:$0xf]
      %v478 = vld [vmem:[%s1 + $0x294] sm:$0xff]
      %v479 = vld [vmem:[%s1 + $0x29c] sm:$0xff]
      %v480 = vld [vmem:[%s1 + $0x2a4] sm:$0xff]
      %v481 = vld [vmem:[%s1 + $0x2ac] sm:$0xff]
      %v482 = vld [vmem:[%s1 + $0x2b4] sm:$0xff]
      %v483 = vld [vmem:[%s1 + $0x2bc] sm:$0xf]
      %v484 = vld [vmem:[%s2] sm:$0xff]
      %v485 = vld [vmem:[%s2 + $0x8] sm:$0xff]
      %v486 = vld [vmem:[%s2 + $0x10] sm:$0xff]
      %v487 = vld [vmem:[%s2 + $0x18] sm:$0xff]
      %v488 = vld [vmem:[%s2 + $0x20] sm:$0xff]
      %v489 = vld [vmem:[%s2 + $0x28] sm:$0xff]
      %v490 = vld [vmem:[%s2 + $0x30] sm:$0xff]
      %v491 = vld [vmem:[%s2 + $0x38] sm:$0xff]
      %v492 = vld [vmem:[%s2 + $0x40] sm:$0xff]
      %v493 = vld [vmem:[%s2 + $0x48] sm:$0xff]
      %v494 = vld [vmem:[%s2 + $0x50] sm:$0xff]
      %v495 = vld [vmem:[%s2 + $0x58] sm:$0xff]
      %v496 = vld [vmem:[%s2 + $0x60] sm:$0xff]
      %v497 = vld [vmem:[%s2 + $0x68] sm:$0xff]
      %v498 = vld [vmem:[%s2 + $0x70] sm:$0xff]
      %v499 = vld [vmem:[%s2 + $0x78] sm:$0xff]
      %501 = vset.pattern.permute.xlu0 0
      %502 = vperm.xlu0 %501, %v484
      %v503 = vpop.permute.xlu0 %502
      %506 = vset.pattern.permute.xlu0 0
      %507 = vperm.xlu0 %506, %v485
      %v508 = vpop.permute.xlu0 %507
      %511 = vset.pattern.permute.xlu0 0
      %512 = vperm.xlu0 %511, %v486
      %v513 = vpop.permute.xlu0 %512
      %516 = vset.pattern.permute.xlu0 0
      %517 = vperm.xlu0 %516, %v487
      %v518 = vpop.permute.xlu0 %517
      %521 = vset.pattern.permute.xlu0 0
      %522 = vperm.xlu0 %521, %v488
      %v523 = vpop.permute.xlu0 %522
      %526 = vset.pattern.permute.xlu0 0
      %527 = vperm.xlu0 %526, %v489
      %v528 = vpop.permute.xlu0 %527
      %531 = vset.pattern.permute.xlu0 0
      %532 = vperm.xlu0 %531, %v490
      %v533 = vpop.permute.xlu0 %532
      %536 = vset.pattern.permute.xlu0 0
      %537 = vperm.xlu0 %536, %v491
      %v538 = vpop.permute.xlu0 %537
      %541 = vset.pattern.permute.xlu0 0
      %542 = vperm.xlu0 %541, %v492
      %v543 = vpop.permute.xlu0 %542
      %546 = vset.pattern.permute.xlu0 0
      %547 = vperm.xlu0 %546, %v493
      %v548 = vpop.permute.xlu0 %547
      %551 = vset.pattern.permute.xlu0 0
      %552 = vperm.xlu0 %551, %v494
      %v553 = vpop.permute.xlu0 %552
      %556 = vset.pattern.permute.xlu0 0
      %557 = vperm.xlu0 %556, %v495
      %v558 = vpop.permute.xlu0 %557
      %561 = vset.pattern.permute.xlu0 0
      %562 = vperm.xlu0 %561, %v496
      %v563 = vpop.permute.xlu0 %562
      %566 = vset.pattern.permute.xlu0 0
      %567 = vperm.xlu0 %566, %v497
      %v568 = vpop.permute.xlu0 %567
      %571 = vset.pattern.permute.xlu0 0
      %572 = vperm.xlu0 %571, %v498
      %v573 = vpop.permute.xlu0 %572
      %576 = vset.pattern.permute.xlu0 0
      %577 = vperm.xlu0 %576, %v499
      %v578 = vpop.permute.xlu0 %577
      %v676 = vunpack.c.l.b16 %v388
      %v677 = vunpack.c.h.b16 %v388
      %v678 = vunpack.c.l.b16 %v389
      %v679 = vunpack.c.h.b16 %v389
      %v680 = vunpack.c.l.b16 %v390
      %v681 = vunpack.c.h.b16 %v390
      %v682 = vunpack.c.l.b16 %v391
      %v683 = vunpack.c.h.b16 %v391
      %v684 = vunpack.c.l.b16 %v392
      %v685 = vunpack.c.h.b16 %v392
      %v686 = vunpack.c.l.b16 %v393
      %v687 = vunpack.c.l.b16 %v394
      %v688 = vunpack.c.h.b16 %v394
      %v689 = vunpack.c.l.b16 %v395
      %v690 = vunpack.c.h.b16 %v395
      %v691 = vunpack.c.l.b16 %v396
      %v692 = vunpack.c.h.b16 %v396
      %v693 = vunpack.c.l.b16 %v397
      %v694 = vunpack.c.h.b16 %v397
      %v695 = vunpack.c.l.b16 %v398
      %v696 = vunpack.c.h.b16 %v398
      %v697 = vunpack.c.l.b16 %v399
      %v698 = vunpack.c.l.b16 %v400
      %v699 = vunpack.c.h.b16 %v400
      %v700 = vunpack.c.l.b16 %v401
      %v701 = vunpack.c.h.b16 %v401
      %v702 = vunpack.c.l.b16 %v402
      %v703 = vunpack.c.h.b16 %v402
      %v704 = vunpack.c.l.b16 %v403
      %v705 = vunpack.c.h.b16 %v403
      %v706 = vunpack.c.l.b16 %v404
      %v707 = vunpack.c.h.b16 %v404
      %v708 = vunpack.c.l.b16 %v405
      %v709 = vunpack.c.l.b16 %v406
      %v710 = vunpack.c.h.b16 %v406
      %v711 = vunpack.c.l.b16 %v407
      %v712 = vunpack.c.h.b16 %v407
      %v713 = vunpack.c.l.b16 %v408
      %v714 = vunpack.c.h.b16 %v408
      %v715 = vunpack.c.l.b16 %v409
      %v716 = vunpack.c.h.b16 %v409
      %v717 = vunpack.c.l.b16 %v410
      %v718 = vunpack.c.h.b16 %v410
      %v719 = vunpack.c.l.b16 %v411
      %v720 = vunpack.c.l.b16 %v412
      %v721 = vunpack.c.h.b16 %v412
      %v722 = vunpack.c.l.b16 %v413
      %v723 = vunpack.c.h.b16 %v413
      %v724 = vunpack.c.l.b16 %v414
      %v725 = vunpack.c.h.b16 %v414
      %v726 = vunpack.c.l.b16 %v415
      %v727 = vunpack.c.h.b16 %v415
      %v728 = vunpack.c.l.b16 %v416
      %v729 = vunpack.c.h.b16 %v416
      %v730 = vunpack.c.l.b16 %v417
      %v731 = vunpack.c.l.b16 %v418
      %v732 = vunpack.c.h.b16 %v418
      %v733 = vunpack.c.l.b16 %v419
      %v734 = vunpack.c.h.b16 %v419
      %v735 = vunpack.c.l.b16 %v420
      %v736 = vunpack.c.h.b16 %v420
      %v737 = vunpack.c.l.b16 %v421
      %v738 = vunpack.c.h.b16 %v421
      %v739 = vunpack.c.l.b16 %v422
      %v740 = vunpack.c.h.b16 %v422
      %v741 = vunpack.c.l.b16 %v423
      %v742 = vunpack.c.l.b16 %v424
      %v743 = vunpack.c.h.b16 %v424
      %v744 = vunpack.c.l.b16 %v425
      %v745 = vunpack.c.h.b16 %v425
      %v746 = vunpack.c.l.b16 %v426
      %v747 = vunpack.c.h.b16 %v426
      %v748 = vunpack.c.l.b16 %v427
      %v749 = vunpack.c.h.b16 %v427
      %v750 = vunpack.c.l.b16 %v428
      %v751 = vunpack.c.h.b16 %v428
      %v752 = vunpack.c.l.b16 %v429
      %v753 = vunpack.c.l.b16 %v430
      %v754 = vunpack.c.h.b16 %v430
      %v755 = vunpack.c.l.b16 %v431
      %v756 = vunpack.c.h.b16 %v431
      %v757 = vunpack.c.l.b16 %v432
      %v758 = vunpack.c.h.b16 %v432
      %v759 = vunpack.c.l.b16 %v433
      %v760 = vunpack.c.h.b16 %v433
      %v761 = vunpack.c.l.b16 %v434
      %v762 = vunpack.c.h.b16 %v434
      %v763 = vunpack.c.l.b16 %v435
      %v764 = vunpack.c.l.b16 %v436
      %v765 = vunpack.c.h.b16 %v436
      %v766 = vunpack.c.l.b16 %v437
      %v767 = vunpack.c.h.b16 %v437
      %v768 = vunpack.c.l.b16 %v438
      %v769 = vunpack.c.h.b16 %v438
      %v770 = vunpack.c.l.b16 %v439
      %v771 = vunpack.c.h.b16 %v439
      %v772 = vunpack.c.l.b16 %v440
      %v773 = vunpack.c.h.b16 %v440
      %v774 = vunpack.c.l.b16 %v441
      %v775 = vunpack.c.l.b16 %v442
      %v776 = vunpack.c.h.b16 %v442
      %v777 = vunpack.c.l.b16 %v443
      %v778 = vunpack.c.h.b16 %v443
      %v779 = vunpack.c.l.b16 %v444
      %v780 = vunpack.c.h.b16 %v444
      %v781 = vunpack.c.l.b16 %v445
      %v782 = vunpack.c.h.b16 %v445
      %v783 = vunpack.c.l.b16 %v446
      %v784 = vunpack.c.h.b16 %v446
      %v785 = vunpack.c.l.b16 %v447
      %v786 = vunpack.c.l.b16 %v448
      %v787 = vunpack.c.h.b16 %v448
      %v788 = vunpack.c.l.b16 %v449
      %v789 = vunpack.c.h.b16 %v449
      %v790 = vunpack.c.l.b16 %v450
      %v791 = vunpack.c.h.b16 %v450
      %v792 = vunpack.c.l.b16 %v451
      %v793 = vunpack.c.h.b16 %v451
      %v794 = vunpack.c.l.b16 %v452
      %v795 = vunpack.c.h.b16 %v452
      %v796 = vunpack.c.l.b16 %v453
      %v797 = vunpack.c.l.b16 %v454
      %v798 = vunpack.c.h.b16 %v454
      %v799 = vunpack.c.l.b16 %v455
      %v800 = vunpack.c.h.b16 %v455
      %v801 = vunpack.c.l.b16 %v456
      %v802 = vunpack.c.h.b16 %v456
      %v803 = vunpack.c.l.b16 %v457
      %v804 = vunpack.c.h.b16 %v457
      %v805 = vunpack.c.l.b16 %v458
      %v806 = vunpack.c.h.b16 %v458
      %v807 = vunpack.c.l.b16 %v459
      %v808 = vunpack.c.l.b16 %v460
      %v809 = vunpack.c.h.b16 %v460
      %v810 = vunpack.c.l.b16 %v461
      %v811 = vunpack.c.h.b16 %v461
      %v812 = vunpack.c.l.b16 %v462
      %v813 = vunpack.c.h.b16 %v462
      %v814 = vunpack.c.l.b16 %v463
      %v815 = vunpack.c.h.b16 %v463
      %v816 = vunpack.c.l.b16 %v464
      %v817 = vunpack.c.h.b16 %v464
      %v818 = vunpack.c.l.b16 %v465
      %v819 = vunpack.c.l.b16 %v466
      %v820 = vunpack.c.h.b16 %v466
      %v821 = vunpack.c.l.b16 %v467
      %v822 = vunpack.c.h.b16 %v467
      %v823 = vunpack.c.l.b16 %v468
      %v824 = vunpack.c.h.b16 %v468
      %v825 = vunpack.c.l.b16 %v469
      %v826 = vunpack.c.h.b16 %v469
      %v827 = vunpack.c.l.b16 %v470
      %v828 = vunpack.c.h.b16 %v470
      %v829 = vunpack.c.l.b16 %v471
      %v830 = vunpack.c.l.b16 %v472
      %v831 = vunpack.c.h.b16 %v472
      %v832 = vunpack.c.l.b16 %v473
      %v833 = vunpack.c.h.b16 %v473
      %v834 = vunpack.c.l.b16 %v474
      %v835 = vunpack.c.h.b16 %v474
      %v836 = vunpack.c.l.b16 %v475
      %v837 = vunpack.c.h.b16 %v475
      %v838 = vunpack.c.l.b16 %v476
      %v839 = vunpack.c.h.b16 %v476
      %v840 = vunpack.c.l.b16 %v477
      %v841 = vunpack.c.l.b16 %v478
      %v842 = vunpack.c.h.b16 %v478
      %v843 = vunpack.c.l.b16 %v479
      %v844 = vunpack.c.h.b16 %v479
      %v845 = vunpack.c.l.b16 %v480
      %v846 = vunpack.c.h.b16 %v480
      %v847 = vunpack.c.l.b16 %v481
      %v848 = vunpack.c.h.b16 %v481
      %v849 = vunpack.c.l.b16 %v482
      %v850 = vunpack.c.h.b16 %v482
      %v851 = vunpack.c.l.b16 %v483
      %v852 = vpack.c.b16 %v687, %v676
      %v853 = vpack.c.b16 %v688, %v677
      %v854 = vpack.c.b16 %v689, %v678
      %v855 = vpack.c.b16 %v690, %v679
      %v856 = vpack.c.b16 %v691, %v680
      %v857 = vpack.c.b16 %v692, %v681
      %v858 = vpack.c.b16 %v693, %v682
      %v859 = vpack.c.b16 %v694, %v683
      %v860 = vpack.c.b16 %v695, %v684
      %v861 = vpack.c.b16 %v696, %v685
      %v862 = vpack.c.b16 %v697, %v686
      %v863 = vpack.c.b16 %v709, %v698
      %v864 = vpack.c.b16 %v710, %v699
      %v865 = vpack.c.b16 %v711, %v700
      %v866 = vpack.c.b16 %v712, %v701
      %v867 = vpack.c.b16 %v713, %v702
      %v868 = vpack.c.b16 %v714, %v703
      %v869 = vpack.c.b16 %v715, %v704
      %v870 = vpack.c.b16 %v716, %v705
      %v871 = vpack.c.b16 %v717, %v706
      %v872 = vpack.c.b16 %v718, %v707
      %v873 = vpack.c.b16 %v719, %v708
      %v874 = vpack.c.b16 %v731, %v720
      %v875 = vpack.c.b16 %v732, %v721
      %v876 = vpack.c.b16 %v733, %v722
      %v877 = vpack.c.b16 %v734, %v723
      %v878 = vpack.c.b16 %v735, %v724
      %v879 = vpack.c.b16 %v736, %v725
      %v880 = vpack.c.b16 %v737, %v726
      %v881 = vpack.c.b16 %v738, %v727
      %v882 = vpack.c.b16 %v739, %v728
      %v883 = vpack.c.b16 %v740, %v729
      %v884 = vpack.c.b16 %v741, %v730
      %v885 = vpack.c.b16 %v753, %v742
      %v886 = vpack.c.b16 %v754, %v743
      %v887 = vpack.c.b16 %v755, %v744
      %v888 = vpack.c.b16 %v756, %v745
      %v889 = vpack.c.b16 %v757, %v746
      %v890 = vpack.c.b16 %v758, %v747
      %v891 = vpack.c.b16 %v759, %v748
      %v892 = vpack.c.b16 %v760, %v749
      %v893 = vpack.c.b16 %v761, %v750
      %v894 = vpack.c.b16 %v762, %v751
      %v895 = vpack.c.b16 %v763, %v752
      %v896 = vpack.c.b16 %v775, %v764
      %v897 = vpack.c.b16 %v776, %v765
      %v898 = vpack.c.b16 %v777, %v766
      %v899 = vpack.c.b16 %v778, %v767
      %v900 = vpack.c.b16 %v779, %v768
      %v901 = vpack.c.b16 %v780, %v769
      %v902 = vpack.c.b16 %v781, %v770
      %v903 = vpack.c.b16 %v782, %v771
      %v904 = vpack.c.b16 %v783, %v772
      %v905 = vpack.c.b16 %v784, %v773
      %v906 = vpack.c.b16 %v785, %v774
      %v907 = vpack.c.b16 %v797, %v786
      %v908 = vpack.c.b16 %v798, %v787
      %v909 = vpack.c.b16 %v799, %v788
      %v910 = vpack.c.b16 %v800, %v789
      %v911 = vpack.c.b16 %v801, %v790
      %v912 = vpack.c.b16 %v802, %v791
      %v913 = vpack.c.b16 %v803, %v792
      %v914 = vpack.c.b16 %v804, %v793
      %v915 = vpack.c.b16 %v805, %v794
      %v916 = vpack.c.b16 %v806, %v795
      %v917 = vpack.c.b16 %v807, %v796
      %v918 = vpack.c.b16 %v819, %v808
      %v919 = vpack.c.b16 %v820, %v809
      %v920 = vpack.c.b16 %v821, %v810
      %v921 = vpack.c.b16 %v822, %v811
      %v922 = vpack.c.b16 %v823, %v812
      %v923 = vpack.c.b16 %v824, %v813
      %v924 = vpack.c.b16 %v825, %v814
      %v925 = vpack.c.b16 %v826, %v815
      %v926 = vpack.c.b16 %v827, %v816
      %v927 = vpack.c.b16 %v828, %v817
      %v928 = vpack.c.b16 %v829, %v818
      %v929 = vpack.c.b16 %v841, %v830
      %v930 = vpack.c.b16 %v842, %v831
      %v931 = vpack.c.b16 %v843, %v832
      %v932 = vpack.c.b16 %v844, %v833
      %v933 = vpack.c.b16 %v845, %v834
      %v934 = vpack.c.b16 %v846, %v835
      %v935 = vpack.c.b16 %v847, %v836
      %v936 = vpack.c.b16 %v848, %v837
      %v937 = vpack.c.b16 %v849, %v838
      %v938 = vpack.c.b16 %v850, %v839
      %v939 = vpack.c.b16 %v851, %v840
      %v1182 = vunpack.c.l.b16 %v226
      %v1183 = vunpack.c.l.b16 %v227
      %v1184 = vunpack.c.l.b16 %v228
      %v1185 = vunpack.c.l.b16 %v229
      %v1186 = vunpack.c.l.b16 %v230
      %v1187 = vunpack.c.l.b16 %v231
      %v1188 = vunpack.c.l.b16 %v232
      %v1189 = vunpack.c.l.b16 %v233
      %v1190 = vunpack.c.l.b16 %v234
      %v1191 = vunpack.c.l.b16 %v235
      %v1192 = vunpack.c.l.b16 %v236
      %v1193 = vunpack.c.l.b16 %v237
      %v1194 = vunpack.c.l.b16 %v238
      %v1195 = vunpack.c.l.b16 %v239
      %v1196 = vunpack.c.l.b16 %v240
      %v1197 = vunpack.c.l.b16 %v241
      %v1198 = vunpack.c.l.b16 %v242
      %v1199 = vunpack.c.l.b16 %v243
      %v1200 = vunpack.c.l.b16 %v244
      %v1201 = vunpack.c.l.b16 %v245
      %v1202 = vunpack.c.l.b16 %v246
      %v1203 = vunpack.c.l.b16 %v247
      %v1204 = vunpack.c.l.b16 %v248
      %v1205 = vunpack.c.l.b16 %v249
      %v1206 = vunpack.c.l.b16 %v250
      %v1207 = vunpack.c.l.b16 %v251
      %v1208 = vunpack.c.l.b16 %v252
      %v1209 = vunpack.c.l.b16 %v253
      %v1210 = vunpack.c.l.b16 %v254
      %v1211 = vunpack.c.l.b16 %v255
      %v1212 = vunpack.c.l.b16 %v256
      %v1213 = vunpack.c.l.b16 %v257
      %v1214 = vunpack.c.l.b16 %v258
      %v1215 = vunpack.c.l.b16 %v259
      %v1216 = vunpack.c.l.b16 %v260
      %v1217 = vunpack.c.l.b16 %v261
      %v1218 = vunpack.c.l.b16 %v262
      %v1219 = vunpack.c.l.b16 %v263
      %v1220 = vunpack.c.l.b16 %v264
      %v1221 = vunpack.c.l.b16 %v265
      %v1222 = vunpack.c.l.b16 %v266
      %v1223 = vunpack.c.l.b16 %v267
      %v1224 = vunpack.c.l.b16 %v268
      %v1225 = vunpack.c.l.b16 %v269
      %v1226 = vunpack.c.l.b16 %v270
      %v1227 = vunpack.c.l.b16 %v271
      %v1228 = vunpack.c.l.b16 %v272
      %v1229 = vunpack.c.l.b16 %v273
      %v1230 = vunpack.c.l.b16 %v274
      %v1231 = vunpack.c.l.b16 %v275
      %v1232 = vunpack.c.l.b16 %v276
      %v1233 = vunpack.c.l.b16 %v277
      %v1234 = vunpack.c.l.b16 %v278
      %v1235 = vunpack.c.l.b16 %v279
      %v1236 = vunpack.c.l.b16 %v280
      %v1237 = vunpack.c.l.b16 %v281
      %v1238 = vunpack.c.l.b16 %v282
      %v1239 = vunpack.c.l.b16 %v283
      %v1240 = vunpack.c.l.b16 %v284
      %v1241 = vunpack.c.l.b16 %v285
      %v1242 = vunpack.c.l.b16 %v286
      %v1243 = vunpack.c.l.b16 %v287
      %v1244 = vunpack.c.l.b16 %v288
      %v1245 = vunpack.c.l.b16 %v289
      %v1246 = vunpack.c.l.b16 %v290
      %v1247 = vunpack.c.l.b16 %v291
      %v1248 = vunpack.c.l.b16 %v292
      %v1249 = vunpack.c.l.b16 %v293
      %v1250 = vunpack.c.l.b16 %v294
      %v1251 = vunpack.c.l.b16 %v295
      %v1252 = vunpack.c.l.b16 %v296
      %v1253 = vunpack.c.l.b16 %v297
      %v1254 = vunpack.c.l.b16 %v298
      %v1255 = vunpack.c.l.b16 %v299
      %v1256 = vunpack.c.l.b16 %v300
      %v1257 = vunpack.c.l.b16 %v301
      %v1258 = vunpack.c.l.b16 %v302
      %v1259 = vunpack.c.l.b16 %v303
      %v1260 = vunpack.c.l.b16 %v304
      %v1261 = vunpack.c.l.b16 %v305
      %v1262 = vunpack.c.l.b16 %v306
      %v1263 = vunpack.c.l.b16 %v307
      %v1264 = vunpack.c.l.b16 %v308
      %v1265 = vunpack.c.l.b16 %v309
      %v1266 = vunpack.c.l.b16 %v310
      %v1267 = vunpack.c.l.b16 %v311
      %v1268 = vunpack.c.l.b16 %v312
      %v1269 = vunpack.c.l.b16 %v313
      %v1270 = vunpack.c.l.b16 %v314
      %v1271 = vunpack.c.l.b16 %v315
      %v1272 = vunpack.c.l.b16 %v316
      %v1273 = vunpack.c.l.b16 %v317
      %v1274 = vunpack.c.l.b16 %v318
      %v1275 = vunpack.c.l.b16 %v319
      %v1276 = vunpack.c.l.b16 %v320
      %v1277 = vunpack.c.l.b16 %v321
      %v1278 = vunpack.c.l.b16 %v322
      %v1279 = vunpack.c.l.b16 %v323
      %v1280 = vunpack.c.l.b16 %v324
      %v1281 = vunpack.c.l.b16 %v325
      %v1282 = vunpack.c.l.b16 %v326
      %v1283 = vunpack.c.l.b16 %v327
      %v1284 = vunpack.c.l.b16 %v328
      %v1285 = vunpack.c.l.b16 %v329
      %v1286 = vunpack.c.l.b16 %v330
      %v1287 = vunpack.c.l.b16 %v331
      %v1288 = vunpack.c.l.b16 %v332
      %v1289 = vunpack.c.l.b16 %v333
      %v1290 = vunpack.c.l.b16 %v334
      %v1291 = vunpack.c.l.b16 %v335
      %v1292 = vunpack.c.l.b16 %v336
      %v1293 = vunpack.c.l.b16 %v337
      %v1294 = vunpack.c.l.b16 %v338
      %v1295 = vunpack.c.l.b16 %v339
      %v1296 = vunpack.c.l.b16 %v340
      %v1297 = vunpack.c.l.b16 %v341
      %v1298 = vunpack.c.l.b16 %v342
      %v1299 = vunpack.c.l.b16 %v343
      %v1300 = vunpack.c.l.b16 %v344
      %v1301 = vunpack.c.l.b16 %v345
      %v1302 = vunpack.c.l.b16 %v346
      %v1303 = vunpack.c.l.b16 %v347
      %v1304 = vunpack.c.l.b16 %v348
      %v1305 = vunpack.c.l.b16 %v349
      %v1306 = vunpack.c.l.b16 %v350
      %v1307 = vunpack.c.l.b16 %v351
      %v1308 = vunpack.c.l.b16 %v352
      %v1309 = vunpack.c.l.b16 %v353
      %v1310 = vunpack.c.l.b16 %v354
      %v1311 = vunpack.c.l.b16 %v355
      %v1312 = vunpack.c.l.b16 %v356
      %v1313 = vunpack.c.l.b16 %v357
      %v1314 = vunpack.c.l.b16 %v358
      %v1315 = vunpack.c.l.b16 %v359
      %v1316 = vunpack.c.l.b16 %v360
      %v1317 = vunpack.c.l.b16 %v361
      %v1318 = vunpack.c.l.b16 %v362
      %v1319 = vunpack.c.l.b16 %v363
      %v1320 = vunpack.c.l.b16 %v364
      %v1321 = vunpack.c.l.b16 %v365
      %v1322 = vunpack.c.l.b16 %v366
      %v1323 = vunpack.c.l.b16 %v367
      %v1324 = vunpack.c.l.b16 %v368
      %v1325 = vunpack.c.l.b16 %v369
      %v1326 = vunpack.c.l.b16 %v370
      %v1327 = vunpack.c.l.b16 %v371
      %v1328 = vunpack.c.l.b16 %v372
      %v1329 = vunpack.c.l.b16 %v373
      %v1330 = vunpack.c.l.b16 %v374
      %v1331 = vunpack.c.l.b16 %v375
      %v1332 = vunpack.c.l.b16 %v376
      %v1333 = vunpack.c.l.b16 %v377
      %v1334 = vunpack.c.l.b16 %v378
      %v1335 = vunpack.c.l.b16 %v379
      %v1336 = vunpack.c.l.b16 %v380
      %v1337 = vunpack.c.l.b16 %v381
      %v1338 = vunpack.c.l.b16 %v382
      %v1339 = vunpack.c.l.b16 %v383
      %v1340 = vunpack.c.l.b16 %v384
      %v1341 = vunpack.c.l.b16 %v385
      %v1342 = vunpack.c.l.b16 %v386
      %v1343 = vunpack.c.l.b16 %v387
      %v1344 = vpack.c.b16 %v1183, %v1182
      %v1345 = vpack.c.b16 %v1185, %v1184
      %v1346 = vpack.c.b16 %v1187, %v1186
      %v1347 = vpack.c.b16 %v1189, %v1188
      %v1348 = vpack.c.b16 %v1191, %v1190
      %v1349 = vpack.c.b16 %v1193, %v1192
      %v1350 = vpack.c.b16 %v1195, %v1194
      %v1351 = vpack.c.b16 %v1197, %v1196
      %v1352 = vpack.c.b16 %v1199, %v1198
      %v1353 = vpack.c.b16 %v1201, %v1200
      %v1354 = vpack.c.b16 %v1203, %v1202
      %v1355 = vpack.c.b16 %v1205, %v1204
      %v1356 = vpack.c.b16 %v1207, %v1206
      %v1357 = vpack.c.b16 %v1209, %v1208
      %v1358 = vpack.c.b16 %v1211, %v1210
      %v1359 = vpack.c.b16 %v1213, %v1212
      %v1360 = vpack.c.b16 %v1215, %v1214
      %v1361 = vpack.c.b16 %v1217, %v1216
      %v1362 = vpack.c.b16 %v1219, %v1218
      %v1363 = vpack.c.b16 %v1221, %v1220
      %v1364 = vpack.c.b16 %v1223, %v1222
      %v1365 = vpack.c.b16 %v1225, %v1224
      %v1366 = vpack.c.b16 %v1227, %v1226
      %v1367 = vpack.c.b16 %v1229, %v1228
      %v1368 = vpack.c.b16 %v1231, %v1230
      %v1369 = vpack.c.b16 %v1233, %v1232
      %v1370 = vpack.c.b16 %v1235, %v1234
      %v1371 = vpack.c.b16 %v1237, %v1236
      %v1372 = vpack.c.b16 %v1239, %v1238
      %v1373 = vpack.c.b16 %v1241, %v1240
      %v1374 = vpack.c.b16 %v1243, %v1242
      %v1375 = vpack.c.b16 %v1245, %v1244
      %v1376 = vpack.c.b16 %v1247, %v1246
      %v1377 = vpack.c.b16 %v1249, %v1248
      %v1378 = vpack.c.b16 %v1251, %v1250
      %v1379 = vpack.c.b16 %v1253, %v1252
      %v1380 = vpack.c.b16 %v1255, %v1254
      %v1381 = vpack.c.b16 %v1257, %v1256
      %v1382 = vpack.c.b16 %v1259, %v1258
      %v1383 = vpack.c.b16 %v1261, %v1260
      %v1384 = vpack.c.b16 %v1263, %v1262
      %v1385 = vpack.c.b16 %v1265, %v1264
      %v1386 = vpack.c.b16 %v1267, %v1266
      %v1387 = vpack.c.b16 %v1269, %v1268
      %v1388 = vpack.c.b16 %v1271, %v1270
      %v1389 = vpack.c.b16 %v1273, %v1272
      %v1390 = vpack.c.b16 %v1275, %v1274
      %v1391 = vpack.c.b16 %v1277, %v1276
      %v1392 = vpack.c.b16 %v1279, %v1278
      %v1393 = vpack.c.b16 %v1281, %v1280
      %v1394 = vpack.c.b16 %v1283, %v1282
      %v1395 = vpack.c.b16 %v1285, %v1284
      %v1396 = vpack.c.b16 %v1287, %v1286
      %v1397 = vpack.c.b16 %v1289, %v1288
      %v1398 = vpack.c.b16 %v1291, %v1290
      %v1399 = vpack.c.b16 %v1293, %v1292
      %v1400 = vpack.c.b16 %v1295, %v1294
      %v1401 = vpack.c.b16 %v1297, %v1296
      %v1402 = vpack.c.b16 %v1299, %v1298
      %v1403 = vpack.c.b16 %v1301, %v1300
      %v1404 = vpack.c.b16 %v1303, %v1302
      %v1405 = vpack.c.b16 %v1305, %v1304
      %v1406 = vpack.c.b16 %v1307, %v1306
      %v1407 = vpack.c.b16 %v1309, %v1308
      %v1408 = vpack.c.b16 %v1311, %v1310
      %v1409 = vpack.c.b16 %v1313, %v1312
      %v1410 = vpack.c.b16 %v1315, %v1314
      %v1411 = vpack.c.b16 %v1317, %v1316
      %v1412 = vpack.c.b16 %v1319, %v1318
      %v1413 = vpack.c.b16 %v1321, %v1320
      %v1414 = vpack.c.b16 %v1323, %v1322
      %v1415 = vpack.c.b16 %v1325, %v1324
      %v1416 = vpack.c.b16 %v1327, %v1326
      %v1417 = vpack.c.b16 %v1329, %v1328
      %v1418 = vpack.c.b16 %v1331, %v1330
      %v1419 = vpack.c.b16 %v1333, %v1332
      %v1420 = vpack.c.b16 %v1335, %v1334
      %v1421 = vpack.c.b16 %v1337, %v1336
      %v1422 = vpack.c.b16 %v1339, %v1338
      %v1423 = vpack.c.b16 %v1341, %v1340
      %v1424 = vpack.c.b16 %v1343, %v1342
      %vm1506 = vcmask 130048
      %v1508 = vsel %vm1506, %v862, 0
      %v1511 = vsel %vm1506, %v873, 0
      %v1514 = vsel %vm1506, %v884, 0
      %v1517 = vsel %vm1506, %v895, 0
      %v1520 = vsel %vm1506, %v906, 0
      %v1523 = vsel %vm1506, %v917, 0
      %v1526 = vsel %vm1506, %v928, 0
      %v1529 = vsel %vm1506, %v939, 0
      %1531 = vmatpush.bf16.msra.mxu0 %v1351
      %1532 = vmatpush.bf16.msra.mxu0 %v1350
      %1533 = vmatpush.bf16.msra.mxu0 %v1349
      %1534 = vmatpush.bf16.msra.mxu0 %v1348
      %1535 = vmatpush.bf16.msra.mxu0 %v1347
      %1536 = vmatpush.bf16.msra.mxu0 %v1346
      %1537 = vmatpush.bf16.msra.mxu0 %v1345
      %1538 = vmatpush.bf16.msra.mxu0 %v1344
      %1539 = vmatmul.bf16.gmra.mxu0 %v852
      %v1540 = vpop.f32.mrf.mxu0
      %v1541 = vadd.f32 %v503, %v1540
      %v1542 = vpop.f32.mrf.mxu0
      %v1543 = vadd.f32 %v508, %v1542
      %1544 = vmatmul.bf16.gmra.mxu0 %v863
      %v1545 = vpop.f32.mrf.mxu0
      %v1546 = vadd.f32 %v513, %v1545
      %v1547 = vpop.f32.mrf.mxu0
      %v1548 = vadd.f32 %v518, %v1547
      %1549 = vmatmul.bf16.gmra.mxu0 %v874
      %v1550 = vpop.f32.mrf.mxu0
      %v1551 = vadd.f32 %v523, %v1550
      %v1552 = vpop.f32.mrf.mxu0
      %v1553 = vadd.f32 %v528, %v1552
      %1554 = vmatmul.bf16.gmra.mxu0 %v885
      %v1555 = vpop.f32.mrf.mxu0
      %v1556 = vadd.f32 %v533, %v1555
      %v1557 = vpop.f32.mrf.mxu0
      %v1558 = vadd.f32 %v538, %v1557
      %1559 = vmatmul.bf16.gmra.mxu0 %v896
      %v1560 = vpop.f32.mrf.mxu0
      %v1561 = vadd.f32 %v543, %v1560
      %v1562 = vpop.f32.mrf.mxu0
      %v1563 = vadd.f32 %v548, %v1562
      %1564 = vmatmul.bf16.gmra.mxu0 %v907
      %v1565 = vpop.f32.mrf.mxu0
      %v1566 = vadd.f32 %v553, %v1565
      %v1567 = vpop.f32.mrf.mxu0
      %v1568 = vadd.f32 %v558, %v1567
      %1569 = vmatmul.bf16.gmra.mxu0 %v918
      %v1570 = vpop.f32.mrf.mxu0
      %v1571 = vadd.f32 %v563, %v1570
      %v1572 = vpop.f32.mrf.mxu0
      %v1573 = vadd.f32 %v568, %v1572
      %1574 = vmatmul.bf16.gmra.mxu0 %v929
      %v1575 = vpop.f32.mrf.mxu0
      %v1576 = vadd.f32 %v573, %v1575
      %v1577 = vpop.f32.mrf.mxu0
      %v1578 = vadd.f32 %v578, %v1577
      %1579 = vdwg.mxu0
      %1580 = vmatpush.bf16.msra.mxu0 %v1359
      %1581 = vmatpush.bf16.msra.mxu0 %v1358
      %1582 = vmatpush.bf16.msra.mxu0 %v1357
      %1583 = vmatpush.bf16.msra.mxu0 %v1356
      %1584 = vmatpush.bf16.msra.mxu0 %v1355
      %1585 = vmatpush.bf16.msra.mxu0 %v1354
      %1586 = vmatpush.bf16.msra.mxu0 %v1353
      %1587 = vmatpush.bf16.msra.mxu0 %v1352
      %1588 = vmatmul.bf16.gmra.mxu0 %v853
      %v1589 = vpop.f32.mrf.mxu0
      %v1590 = vadd.f32 %v1541, %v1589
      %v1591 = vpop.f32.mrf.mxu0
      %v1592 = vadd.f32 %v1543, %v1591
      %1593 = vmatmul.bf16.gmra.mxu0 %v864
      %v1594 = vpop.f32.mrf.mxu0
      %v1595 = vadd.f32 %v1546, %v1594
      %v1596 = vpop.f32.mrf.mxu0
      %v1597 = vadd.f32 %v1548, %v1596
      %1598 = vmatmul.bf16.gmra.mxu0 %v875
      %v1599 = vpop.f32.mrf.mxu0
      %v1600 = vadd.f32 %v1551, %v1599
      %v1601 = vpop.f32.mrf.mxu0
      %v1602 = vadd.f32 %v1553, %v1601
      %1603 = vmatmul.bf16.gmra.mxu0 %v886
      %v1604 = vpop.f32.mrf.mxu0
      %v1605 = vadd.f32 %v1556, %v1604
      %v1606 = vpop.f32.mrf.mxu0
      %v1607 = vadd.f32 %v1558, %v1606
      %1608 = vmatmul.bf16.gmra.mxu0 %v897
      %v1609 = vpop.f32.mrf.mxu0
      %v1610 = vadd.f32 %v1561, %v1609
      %v1611 = vpop.f32.mrf.mxu0
      %v1612 = vadd.f32 %v1563, %v1611
      %1613 = vmatmul.bf16.gmra.mxu0 %v908
      %v1614 = vpop.f32.mrf.mxu0
      %v1615 = vadd.f32 %v1566, %v1614
      %v1616 = vpop.f32.mrf.mxu0
      %v1617 = vadd.f32 %v1568, %v1616
      %1618 = vmatmul.bf16.gmra.mxu0 %v919
      %v1619 = vpop.f32.mrf.mxu0
      %v1620 = vadd.f32 %v1571, %v1619
      %v1621 = vpop.f32.mrf.mxu0
      %v1622 = vadd.f32 %v1573, %v1621
      %1623 = vmatmul.bf16.gmra.mxu0 %v930
      %v1624 = vpop.f32.mrf.mxu0
      %v1625 = vadd.f32 %v1576, %v1624
      %v1626 = vpop.f32.mrf.mxu0
      %v1627 = vadd.f32 %v1578, %v1626
      %1628 = vdwg.mxu0
      %1629 = vmatpush.bf16.msra.mxu0 %v1367
      %1630 = vmatpush.bf16.msra.mxu0 %v1366
      %1631 = vmatpush.bf16.msra.mxu0 %v1365
      %1632 = vmatpush.bf16.msra.mxu0 %v1364
      %1633 = vmatpush.bf16.msra.mxu0 %v1363
      %1634 = vmatpush.bf16.msra.mxu0 %v1362
      %1635 = vmatpush.bf16.msra.mxu0 %v1361
      %1636 = vmatpush.bf16.msra.mxu0 %v1360
      %1637 = vmatmul.bf16.gmra.mxu0 %v854
      %v1638 = vpop.f32.mrf.mxu0
      %v1639 = vadd.f32 %v1590, %v1638
      %v1640 = vpop.f32.mrf.mxu0
      %v1641 = vadd.f32 %v1592, %v1640
      %1642 = vmatmul.bf16.gmra.mxu0 %v865
      %v1643 = vpop.f32.mrf.mxu0
      %v1644 = vadd.f32 %v1595, %v1643
      %v1645 = vpop.f32.mrf.mxu0
      %v1646 = vadd.f32 %v1597, %v1645
      %1647 = vmatmul.bf16.gmra.mxu0 %v876
      %v1648 = vpop.f32.mrf.mxu0
      %v1649 = vadd.f32 %v1600, %v1648
      %v1650 = vpop.f32.mrf.mxu0
      %v1651 = vadd.f32 %v1602, %v1650
      %1652 = vmatmul.bf16.gmra.mxu0 %v887
      %v1653 = vpop.f32.mrf.mxu0
      %v1654 = vadd.f32 %v1605, %v1653
      %v1655 = vpop.f32.mrf.mxu0
      %v1656 = vadd.f32 %v1607, %v1655
      %1657 = vmatmul.bf16.gmra.mxu0 %v898
      %v1658 = vpop.f32.mrf.mxu0
      %v1659 = vadd.f32 %v1610, %v1658
      %v1660 = vpop.f32.mrf.mxu0
      %v1661 = vadd.f32 %v1612, %v1660
      %1662 = vmatmul.bf16.gmra.mxu0 %v909
      %v1663 = vpop.f32.mrf.mxu0
      %v1664 = vadd.f32 %v1615, %v1663
      %v1665 = vpop.f32.mrf.mxu0
      %v1666 = vadd.f32 %v1617, %v1665
      %1667 = vmatmul.bf16.gmra.mxu0 %v920
      %v1668 = vpop.f32.mrf.mxu0
      %v1669 = vadd.f32 %v1620, %v1668
      %v1670 = vpop.f32.mrf.mxu0
      %v1671 = vadd.f32 %v1622, %v1670
      %1672 = vmatmul.bf16.gmra.mxu0 %v931
      %v1673 = vpop.f32.mrf.mxu0
      %v1674 = vadd.f32 %v1625, %v1673
      %v1675 = vpop.f32.mrf.mxu0
      %v1676 = vadd.f32 %v1627, %v1675
      %1677 = vdwg.mxu0
      %1678 = vmatpush.bf16.msra.mxu0 %v1375
      %1679 = vmatpush.bf16.msra.mxu0 %v1374
      %1680 = vmatpush.bf16.msra.mxu0 %v1373
      %1681 = vmatpush.bf16.msra.mxu0 %v1372
      %1682 = vmatpush.bf16.msra.mxu0 %v1371
      %1683 = vmatpush.bf16.msra.mxu0 %v1370
      %1684 = vmatpush.bf16.msra.mxu0 %v1369
      %1685 = vmatpush.bf16.msra.mxu0 %v1368
      %1686 = vmatmul.bf16.gmra.mxu0 %v855
      %v1687 = vpop.f32.mrf.mxu0
      %v1688 = vadd.f32 %v1639, %v1687
      %v1689 = vpop.f32.mrf.mxu0
      %v1690 = vadd.f32 %v1641, %v1689
      %1691 = vmatmul.bf16.gmra.mxu0 %v866
      %v1692 = vpop.f32.mrf.mxu0
      %v1693 = vadd.f32 %v1644, %v1692
      %v1694 = vpop.f32.mrf.mxu0
      %v1695 = vadd.f32 %v1646, %v1694
      %1696 = vmatmul.bf16.gmra.mxu0 %v877
      %v1697 = vpop.f32.mrf.mxu0
      %v1698 = vadd.f32 %v1649, %v1697
      %v1699 = vpop.f32.mrf.mxu0
      %v1700 = vadd.f32 %v1651, %v1699
      %1701 = vmatmul.bf16.gmra.mxu0 %v888
      %v1702 = vpop.f32.mrf.mxu0
      %v1703 = vadd.f32 %v1654, %v1702
      %v1704 = vpop.f32.mrf.mxu0
      %v1705 = vadd.f32 %v1656, %v1704
      %1706 = vmatmul.bf16.gmra.mxu0 %v899
      %v1707 = vpop.f32.mrf.mxu0
      %v1708 = vadd.f32 %v1659, %v1707
      %v1709 = vpop.f32.mrf.mxu0
      %v1710 = vadd.f32 %v1661, %v1709
      %1711 = vmatmul.bf16.gmra.mxu0 %v910
      %v1712 = vpop.f32.mrf.mxu0
      %v1713 = vadd.f32 %v1664, %v1712
      %v1714 = vpop.f32.mrf.mxu0
      %v1715 = vadd.f32 %v1666, %v1714
      %1716 = vmatmul.bf16.gmra.mxu0 %v921
      %v1717 = vpop.f32.mrf.mxu0
      %v1718 = vadd.f32 %v1669, %v1717
      %v1719 = vpop.f32.mrf.mxu0
      %v1720 = vadd.f32 %v1671, %v1719
      %1721 = vmatmul.bf16.gmra.mxu0 %v932
      %v1722 = vpop.f32.mrf.mxu0
      %v1723 = vadd.f32 %v1674, %v1722
      %v1724 = vpop.f32.mrf.mxu0
      %v1725 = vadd.f32 %v1676, %v1724
      %1726 = vdwg.mxu0
      %1727 = vmatpush.bf16.msra.mxu0 %v1383
      %1728 = vmatpush.bf16.msra.mxu0 %v1382
      %1729 = vmatpush.bf16.msra.mxu0 %v1381
      %1730 = vmatpush.bf16.msra.mxu0 %v1380
      %1731 = vmatpush.bf16.msra.mxu0 %v1379
      %1732 = vmatpush.bf16.msra.mxu0 %v1378
      %1733 = vmatpush.bf16.msra.mxu0 %v1377
      %1734 = vmatpush.bf16.msra.mxu0 %v1376
      %1735 = vmatmul.bf16.gmra.mxu0 %v856
      %v1736 = vpop.f32.mrf.mxu0
      %v1737 = vadd.f32 %v1688, %v1736
      %v1738 = vpop.f32.mrf.mxu0
      %v1739 = vadd.f32 %v1690, %v1738
      %1740 = vmatmul.bf16.gmra.mxu0 %v867
      %v1741 = vpop.f32.mrf.mxu0
      %v1742 = vadd.f32 %v1693, %v1741
      %v1743 = vpop.f32.mrf.mxu0
      %v1744 = vadd.f32 %v1695, %v1743
      %1745 = vmatmul.bf16.gmra.mxu0 %v878
      %v1746 = vpop.f32.mrf.mxu0
      %v1747 = vadd.f32 %v1698, %v1746
      %v1748 = vpop.f32.mrf.mxu0
      %v1749 = vadd.f32 %v1700, %v1748
      %1750 = vmatmul.bf16.gmra.mxu0 %v889
      %v1751 = vpop.f32.mrf.mxu0
      %v1752 = vadd.f32 %v1703, %v1751
      %v1753 = vpop.f32.mrf.mxu0
      %v1754 = vadd.f32 %v1705, %v1753
      %1755 = vmatmul.bf16.gmra.mxu0 %v900
      %v1756 = vpop.f32.mrf.mxu0
      %v1757 = vadd.f32 %v1708, %v1756
      %v1758 = vpop.f32.mrf.mxu0
      %v1759 = vadd.f32 %v1710, %v1758
      %1760 = vmatmul.bf16.gmra.mxu0 %v911
      %v1761 = vpop.f32.mrf.mxu0
      %v1762 = vadd.f32 %v1713, %v1761
      %v1763 = vpop.f32.mrf.mxu0
      %v1764 = vadd.f32 %v1715, %v1763
      %1765 = vmatmul.bf16.gmra.mxu0 %v922
      %v1766 = vpop.f32.mrf.mxu0
      %v1767 = vadd.f32 %v1718, %v1766
      %v1768 = vpop.f32.mrf.mxu0
      %v1769 = vadd.f32 %v1720, %v1768
      %1770 = vmatmul.bf16.gmra.mxu0 %v933
      %v1771 = vpop.f32.mrf.mxu0
      %v1772 = vadd.f32 %v1723, %v1771
      %v1773 = vpop.f32.mrf.mxu0
      %v1774 = vadd.f32 %v1725, %v1773
      %1775 = vdwg.mxu0
      %1776 = vmatpush.bf16.msra.mxu0 %v1391
      %1777 = vmatpush.bf16.msra.mxu0 %v1390
      %1778 = vmatpush.bf16.msra.mxu0 %v1389
      %1779 = vmatpush.bf16.msra.mxu0 %v1388
      %1780 = vmatpush.bf16.msra.mxu0 %v1387
      %1781 = vmatpush.bf16.msra.mxu0 %v1386
      %1782 = vmatpush.bf16.msra.mxu0 %v1385
      %1783 = vmatpush.bf16.msra.mxu0 %v1384
      %1784 = vmatmul.bf16.gmra.mxu0 %v857
      %v1785 = vpop.f32.mrf.mxu0
      %v1786 = vadd.f32 %v1737, %v1785
      %v1787 = vpop.f32.mrf.mxu0
      %v1788 = vadd.f32 %v1739, %v1787
      %1789 = vmatmul.bf16.gmra.mxu0 %v868
      %v1790 = vpop.f32.mrf.mxu0
      %v1791 = vadd.f32 %v1742, %v1790
      %v1792 = vpop.f32.mrf.mxu0
      %v1793 = vadd.f32 %v1744, %v1792
      %1794 = vmatmul.bf16.gmra.mxu0 %v879
      %v1795 = vpop.f32.mrf.mxu0
      %v1796 = vadd.f32 %v1747, %v1795
      %v1797 = vpop.f32.mrf.mxu0
      %v1798 = vadd.f32 %v1749, %v1797
      %1799 = vmatmul.bf16.gmra.mxu0 %v890
      %v1800 = vpop.f32.mrf.mxu0
      %v1801 = vadd.f32 %v1752, %v1800
      %v1802 = vpop.f32.mrf.mxu0
      %v1803 = vadd.f32 %v1754, %v1802
      %1804 = vmatmul.bf16.gmra.mxu0 %v901
      %v1805 = vpop.f32.mrf.mxu0
      %v1806 = vadd.f32 %v1757, %v1805
      %v1807 = vpop.f32.mrf.mxu0
      %v1808 = vadd.f32 %v1759, %v1807
      %1809 = vmatmul.bf16.gmra.mxu0 %v912
      %v1810 = vpop.f32.mrf.mxu0
      %v1811 = vadd.f32 %v1762, %v1810
      %v1812 = vpop.f32.mrf.mxu0
      %v1813 = vadd.f32 %v1764, %v1812
      %1814 = vmatmul.bf16.gmra.mxu0 %v923
      %v1815 = vpop.f32.mrf.mxu0
      %v1816 = vadd.f32 %v1767, %v1815
      %v1817 = vpop.f32.mrf.mxu0
      %v1818 = vadd.f32 %v1769, %v1817
      %1819 = vmatmul.bf16.gmra.mxu0 %v934
      %v1820 = vpop.f32.mrf.mxu0
      %v1821 = vadd.f32 %v1772, %v1820
      %v1822 = vpop.f32.mrf.mxu0
      %v1823 = vadd.f32 %v1774, %v1822
      %1824 = vdwg.mxu0
      %1825 = vmatpush.bf16.msra.mxu0 %v1399
      %1826 = vmatpush.bf16.msra.mxu0 %v1398
      %1827 = vmatpush.bf16.msra.mxu0 %v1397
      %1828 = vmatpush.bf16.msra.mxu0 %v1396
      %1829 = vmatpush.bf16.msra.mxu0 %v1395
      %1830 = vmatpush.bf16.msra.mxu0 %v1394
      %1831 = vmatpush.bf16.msra.mxu0 %v1393
      %1832 = vmatpush.bf16.msra.mxu0 %v1392
      %1833 = vmatmul.bf16.gmra.mxu0 %v858
      %v1834 = vpop.f32.mrf.mxu0
      %v1835 = vadd.f32 %v1786, %v1834
      %v1836 = vpop.f32.mrf.mxu0
      %v1837 = vadd.f32 %v1788, %v1836
      %1838 = vmatmul.bf16.gmra.mxu0 %v869
      %v1839 = vpop.f32.mrf.mxu0
      %v1840 = vadd.f32 %v1791, %v1839
      %v1841 = vpop.f32.mrf.mxu0
      %v1842 = vadd.f32 %v1793, %v1841
      %1843 = vmatmul.bf16.gmra.mxu0 %v880
      %v1844 = vpop.f32.mrf.mxu0
      %v1845 = vadd.f32 %v1796, %v1844
      %v1846 = vpop.f32.mrf.mxu0
      %v1847 = vadd.f32 %v1798, %v1846
      %1848 = vmatmul.bf16.gmra.mxu0 %v891
      %v1849 = vpop.f32.mrf.mxu0
      %v1850 = vadd.f32 %v1801, %v1849
      %v1851 = vpop.f32.mrf.mxu0
      %v1852 = vadd.f32 %v1803, %v1851
      %1853 = vmatmul.bf16.gmra.mxu0 %v902
      %v1854 = vpop.f32.mrf.mxu0
      %v1855 = vadd.f32 %v1806, %v1854
      %v1856 = vpop.f32.mrf.mxu0
      %v1857 = vadd.f32 %v1808, %v1856
      %1858 = vmatmul.bf16.gmra.mxu0 %v913
      %v1859 = vpop.f32.mrf.mxu0
      %v1860 = vadd.f32 %v1811, %v1859
      %v1861 = vpop.f32.mrf.mxu0
      %v1862 = vadd.f32 %v1813, %v1861
      %1863 = vmatmul.bf16.gmra.mxu0 %v924
      %v1864 = vpop.f32.mrf.mxu0
      %v1865 = vadd.f32 %v1816, %v1864
      %v1866 = vpop.f32.mrf.mxu0
      %v1867 = vadd.f32 %v1818, %v1866
      %1868 = vmatmul.bf16.gmra.mxu0 %v935
      %v1869 = vpop.f32.mrf.mxu0
      %v1870 = vadd.f32 %v1821, %v1869
      %v1871 = vpop.f32.mrf.mxu0
      %v1872 = vadd.f32 %v1823, %v1871
      %1873 = vdwg.mxu0
      %1874 = vmatpush.bf16.msra.mxu0 %v1407
      %1875 = vmatpush.bf16.msra.mxu0 %v1406
      %1876 = vmatpush.bf16.msra.mxu0 %v1405
      %1877 = vmatpush.bf16.msra.mxu0 %v1404
      %1878 = vmatpush.bf16.msra.mxu0 %v1403
      %1879 = vmatpush.bf16.msra.mxu0 %v1402
      %1880 = vmatpush.bf16.msra.mxu0 %v1401
      %1881 = vmatpush.bf16.msra.mxu0 %v1400
      %1882 = vmatmul.bf16.gmra.mxu0 %v859
      %v1883 = vpop.f32.mrf.mxu0
      %v1884 = vadd.f32 %v1835, %v1883
      %v1885 = vpop.f32.mrf.mxu0
      %v1886 = vadd.f32 %v1837, %v1885
      %1887 = vmatmul.bf16.gmra.mxu0 %v870
      %v1888 = vpop.f32.mrf.mxu0
      %v1889 = vadd.f32 %v1840, %v1888
      %v1890 = vpop.f32.mrf.mxu0
      %v1891 = vadd.f32 %v1842, %v1890
      %1892 = vmatmul.bf16.gmra.mxu0 %v881
      %v1893 = vpop.f32.mrf.mxu0
      %v1894 = vadd.f32 %v1845, %v1893
      %v1895 = vpop.f32.mrf.mxu0
      %v1896 = vadd.f32 %v1847, %v1895
      %1897 = vmatmul.bf16.gmra.mxu0 %v892
      %v1898 = vpop.f32.mrf.mxu0
      %v1899 = vadd.f32 %v1850, %v1898
      %v1900 = vpop.f32.mrf.mxu0
      %v1901 = vadd.f32 %v1852, %v1900
      %1902 = vmatmul.bf16.gmra.mxu0 %v903
      %v1903 = vpop.f32.mrf.mxu0
      %v1904 = vadd.f32 %v1855, %v1903
      %v1905 = vpop.f32.mrf.mxu0
      %v1906 = vadd.f32 %v1857, %v1905
      %1907 = vmatmul.bf16.gmra.mxu0 %v914
      %v1908 = vpop.f32.mrf.mxu0
      %v1909 = vadd.f32 %v1860, %v1908
      %v1910 = vpop.f32.mrf.mxu0
      %v1911 = vadd.f32 %v1862, %v1910
      %1912 = vmatmul.bf16.gmra.mxu0 %v925
      %v1913 = vpop.f32.mrf.mxu0
      %v1914 = vadd.f32 %v1865, %v1913
      %v1915 = vpop.f32.mrf.mxu0
      %v1916 = vadd.f32 %v1867, %v1915
      %1917 = vmatmul.bf16.gmra.mxu0 %v936
      %v1918 = vpop.f32.mrf.mxu0
      %v1919 = vadd.f32 %v1870, %v1918
      %v1920 = vpop.f32.mrf.mxu0
      %v1921 = vadd.f32 %v1872, %v1920
      %1922 = vdwg.mxu0
      %1923 = vmatpush.bf16.msra.mxu0 %v1415
      %1924 = vmatpush.bf16.msra.mxu0 %v1414
      %1925 = vmatpush.bf16.msra.mxu0 %v1413
      %1926 = vmatpush.bf16.msra.mxu0 %v1412
      %1927 = vmatpush.bf16.msra.mxu0 %v1411
      %1928 = vmatpush.bf16.msra.mxu0 %v1410
      %1929 = vmatpush.bf16.msra.mxu0 %v1409
      %1930 = vmatpush.bf16.msra.mxu0 %v1408
      %1931 = vmatmul.bf16.gmra.mxu0 %v860
      %v1932 = vpop.f32.mrf.mxu0
      %v1933 = vadd.f32 %v1884, %v1932
      %v1934 = vpop.f32.mrf.mxu0
      %v1935 = vadd.f32 %v1886, %v1934
      %1936 = vmatmul.bf16.gmra.mxu0 %v871
      %v1937 = vpop.f32.mrf.mxu0
      %v1938 = vadd.f32 %v1889, %v1937
      %v1939 = vpop.f32.mrf.mxu0
      %v1940 = vadd.f32 %v1891, %v1939
      %1941 = vmatmul.bf16.gmra.mxu0 %v882
      %v1942 = vpop.f32.mrf.mxu0
      %v1943 = vadd.f32 %v1894, %v1942
      %v1944 = vpop.f32.mrf.mxu0
      %v1945 = vadd.f32 %v1896, %v1944
      %1946 = vmatmul.bf16.gmra.mxu0 %v893
      %v1947 = vpop.f32.mrf.mxu0
      %v1948 = vadd.f32 %v1899, %v1947
      %v1949 = vpop.f32.mrf.mxu0
      %v1950 = vadd.f32 %v1901, %v1949
      %1951 = vmatmul.bf16.gmra.mxu0 %v904
      %v1952 = vpop.f32.mrf.mxu0
      %v1953 = vadd.f32 %v1904, %v1952
      %v1954 = vpop.f32.mrf.mxu0
      %v1955 = vadd.f32 %v1906, %v1954
      %1956 = vmatmul.bf16.gmra.mxu0 %v915
      %v1957 = vpop.f32.mrf.mxu0
      %v1958 = vadd.f32 %v1909, %v1957
      %v1959 = vpop.f32.mrf.mxu0
      %v1960 = vadd.f32 %v1911, %v1959
      %1961 = vmatmul.bf16.gmra.mxu0 %v926
      %v1962 = vpop.f32.mrf.mxu0
      %v1963 = vadd.f32 %v1914, %v1962
      %v1964 = vpop.f32.mrf.mxu0
      %v1965 = vadd.f32 %v1916, %v1964
      %1966 = vmatmul.bf16.gmra.mxu0 %v937
      %v1967 = vpop.f32.mrf.mxu0
      %v1968 = vadd.f32 %v1919, %v1967
      %v1969 = vpop.f32.mrf.mxu0
      %v1970 = vadd.f32 %v1921, %v1969
      %1971 = vdwg.mxu0
      %1972 = vmatpush.bf16.msra.mxu0 %v1423
      %1973 = vmatpush.bf16.msra.mxu0 %v1422
      %1974 = vmatpush.bf16.msra.mxu0 %v1421
      %1975 = vmatpush.bf16.msra.mxu0 %v1420
      %1976 = vmatpush.bf16.msra.mxu0 %v1419
      %1977 = vmatpush.bf16.msra.mxu0 %v1418
      %1978 = vmatpush.bf16.msra.mxu0 %v1417
      %1979 = vmatpush.bf16.msra.mxu0 %v1416
      %1980 = vmatmul.bf16.gmra.mxu0 %v861
      %v1981 = vpop.f32.mrf.mxu0
      %v1982 = vadd.f32 %v1933, %v1981
      %v1983 = vpop.f32.mrf.mxu0
      %v1984 = vadd.f32 %v1935, %v1983
      %1985 = vmatmul.bf16.gmra.mxu0 %v872
      %v1986 = vpop.f32.mrf.mxu0
      %v1987 = vadd.f32 %v1938, %v1986
      %v1988 = vpop.f32.mrf.mxu0
      %v1989 = vadd.f32 %v1940, %v1988
      %1990 = vmatmul.bf16.gmra.mxu0 %v883
      %v1991 = vpop.f32.mrf.mxu0
      %v1992 = vadd.f32 %v1943, %v1991
      %v1993 = vpop.f32.mrf.mxu0
      %v1994 = vadd.f32 %v1945, %v1993
      %1995 = vmatmul.bf16.gmra.mxu0 %v894
      %v1996 = vpop.f32.mrf.mxu0
      %v1997 = vadd.f32 %v1948, %v1996
      %v1998 = vpop.f32.mrf.mxu0
      %v1999 = vadd.f32 %v1950, %v1998
      %2000 = vmatmul.bf16.gmra.mxu0 %v905
      %v2001 = vpop.f32.mrf.mxu0
      %v2002 = vadd.f32 %v1953, %v2001
      %v2003 = vpop.f32.mrf.mxu0
      %v2004 = vadd.f32 %v1955, %v2003
      %2005 = vmatmul.bf16.gmra.mxu0 %v916
      %v2006 = vpop.f32.mrf.mxu0
      %v2007 = vadd.f32 %v1958, %v2006
      %v2008 = vpop.f32.mrf.mxu0
      %v2009 = vadd.f32 %v1960, %v2008
      %2010 = vmatmul.bf16.gmra.mxu0 %v927
      %v2011 = vpop.f32.mrf.mxu0
      %v2012 = vadd.f32 %v1963, %v2011
      %v2013 = vpop.f32.mrf.mxu0
      %v2014 = vadd.f32 %v1965, %v2013
      %2015 = vmatmul.bf16.gmra.mxu0 %v938
      %v2016 = vpop.f32.mrf.mxu0
      %v2017 = vadd.f32 %v1968, %v2016
      %v2018 = vpop.f32.mrf.mxu0
      %v2019 = vadd.f32 %v1970, %v2018
      %2020 = vdwg.mxu0
      %2021 = vmatpush.bf16.msra.mxu0 0
      %2022 = vmatpush.bf16.msra.mxu0 0
      %2023 = vmatpush.bf16.msra.mxu0 0
      %2024 = vmatpush.bf16.msra.mxu0 0
      %2025 = vmatpush.bf16.msra.mxu0 0
      %2026 = vmatpush.bf16.msra.mxu0 0
      %2027 = vmatpush.bf16.msra.mxu0 0
      %2028 = vmatpush.bf16.msra.mxu0 %v1424
      %2029 = vmatmul.bf16.gmra.mxu0 %v1508
      %v2030 = vpop.f32.mrf.mxu0
      %v2031 = vadd.f32 %v1982, %v2030
      %v2032 = vpop.f32.mrf.mxu0
      %v2033 = vadd.f32 %v1984, %v2032
      %2034 = vmatmul.bf16.gmra.mxu0 %v1511
      %v2035 = vpop.f32.mrf.mxu0
      %v2036 = vadd.f32 %v1987, %v2035
      %v2037 = vpop.f32.mrf.mxu0
      %v2038 = vadd.f32 %v1989, %v2037
      %2039 = vmatmul.bf16.gmra.mxu0 %v1514
      %v2040 = vpop.f32.mrf.mxu0
      %v2041 = vadd.f32 %v1992, %v2040
      %v2042 = vpop.f32.mrf.mxu0
      %v2043 = vadd.f32 %v1994, %v2042
      %2044 = vmatmul.bf16.gmra.mxu0 %v1517
      %v2045 = vpop.f32.mrf.mxu0
      %v2046 = vadd.f32 %v1997, %v2045
      %v2047 = vpop.f32.mrf.mxu0
      %v2048 = vadd.f32 %v1999, %v2047
      %2049 = vmatmul.bf16.gmra.mxu0 %v1520
      %v2050 = vpop.f32.mrf.mxu0
      %v2051 = vadd.f32 %v2002, %v2050
      %v2052 = vpop.f32.mrf.mxu0
      %v2053 = vadd.f32 %v2004, %v2052
      %2054 = vmatmul.bf16.gmra.mxu0 %v1523
      %v2055 = vpop.f32.mrf.mxu0
      %v2056 = vadd.f32 %v2007, %v2055
      %v2057 = vpop.f32.mrf.mxu0
      %v2058 = vadd.f32 %v2009, %v2057
      %2059 = vmatmul.bf16.gmra.mxu0 %v1526
      %v2060 = vpop.f32.mrf.mxu0
      %v2061 = vadd.f32 %v2012, %v2060
      %v2062 = vpop.f32.mrf.mxu0
      %v2063 = vadd.f32 %v2014, %v2062
      %2064 = vmatmul.bf16.gmra.mxu0 %v1529
      %v2065 = vpop.f32.mrf.mxu0
      %v2066 = vadd.f32 %v2017, %v2065
      %v2067 = vpop.f32.mrf.mxu0
      %v2068 = vadd.f32 %v2019, %v2067
      %2069 = vdwg.mxu0
      %v2070 = vmul.f32 %v2031, %v2031
      %v2071 = vmul.f32 %v2033, %v2033
      %v2072 = vmul.f32 %v2036, %v2036
      %v2073 = vmul.f32 %v2038, %v2038
      %v2074 = vmul.f32 %v2041, %v2041
      %v2075 = vmul.f32 %v2043, %v2043
      %v2076 = vmul.f32 %v2046, %v2046
      %v2077 = vmul.f32 %v2048, %v2048
      %v2078 = vmul.f32 %v2051, %v2051
      %v2079 = vmul.f32 %v2053, %v2053
      %v2080 = vmul.f32 %v2056, %v2056
      %v2081 = vmul.f32 %v2058, %v2058
      %v2082 = vmul.f32 %v2061, %v2061
      %v2083 = vmul.f32 %v2063, %v2063
      %v2084 = vmul.f32 %v2066, %v2066
      %v2085 = vmul.f32 %v2068, %v2068
      %v2086 = vpack.c.bf16 %v2071, %v2070
      %v2087 = vpack.c.bf16 %v2073, %v2072
      %v2088 = vpack.c.bf16 %v2075, %v2074
      %v2089 = vpack.c.bf16 %v2077, %v2076
      %v2090 = vpack.c.bf16 %v2079, %v2078
      %v2091 = vpack.c.bf16 %v2081, %v2080
      %v2092 = vpack.c.bf16 %v2083, %v2082
      %v2093 = vpack.c.bf16 %v2085, %v2084
      %v2094 = vld [vmem:[%s3] sm:$0xf]
      %v2095 = vld [vmem:[%s3 + $0x4] sm:$0xf]
      %v2096 = vld [vmem:[%s3 + $0x8] sm:$0xf]
      %v2097 = vld [vmem:[%s3 + $0xc] sm:$0xf]
      %v2098 = vld [vmem:[%s3 + $0x10] sm:$0xf]
      %v2099 = vld [vmem:[%s3 + $0x14] sm:$0xf]
      %v2100 = vld [vmem:[%s3 + $0x18] sm:$0xf]
      %v2101 = vld [vmem:[%s3 + $0x1c] sm:$0xf]
      %v2102 = vld [vmem:[%s3 + $0x20] sm:$0xf]
      %v2112 = vunpack.c.l.b16 %v2094
      %v2113 = vunpack.c.l.b16 %v2095
      %v2114 = vunpack.c.l.b16 %v2096
      %v2115 = vunpack.c.l.b16 %v2097
      %v2116 = vunpack.c.l.b16 %v2098
      %v2117 = vunpack.c.l.b16 %v2099
      %v2118 = vunpack.c.l.b16 %v2100
      %v2119 = vunpack.c.l.b16 %v2101
      %v2120 = vunpack.c.l.b16 %v2102
      %v2121 = vpack.c.b16 %v2113, %v2112
      %v2122 = vpack.c.b16 %v2115, %v2114
      %v2123 = vpack.c.b16 %v2117, %v2116
      %v2124 = vpack.c.b16 %v2119, %v2118
      %v2125 = vpack.c.b16 %v2120, %v2120
      %vm2130 = vcmask 588800
      %v2132 = vsel %vm2130, %v2086, 0
      %v2135 = vsel %vm2130, %v2087, 0
      %v2138 = vsel %vm2130, %v2088, 0
      %v2141 = vsel %vm2130, %v2089, 0
      %v2144 = vsel %vm2130, %v2090, 0
      %v2147 = vsel %vm2130, %v2091, 0
      %v2150 = vsel %vm2130, %v2092, 0
      %v2153 = vsel %vm2130, %v2093, 0
      %vm2155 = vcmask 1043456
      %v2157 = vsel %vm2155, %v2125, 0
      %2159 = vmatpush.bf16.msra.mxu0 0
      %2160 = vmatpush.bf16.msra.mxu0 0
      %2161 = vmatpush.bf16.msra.mxu0 0
      %2162 = vmatpush.bf16.msra.mxu0 %v2157
      %2163 = vmatpush.bf16.msra.mxu0 %v2124
      %2164 = vmatpush.bf16.msra.mxu0 %v2123
      %2165 = vmatpush.bf16.msra.mxu0 %v2122
      %2166 = vmatpush.bf16.msra.mxu0 %v2121
      %2167 = vmatmul.bf16.gmra.mxu0 %v2132
      %v2168 = vpop.f32.mrf.mxu0
      %v2169 = vadd.f32 0.0, %v2168
      %v2170 = vpop.f32.mrf.mxu0
      %v2171 = vadd.f32 0.0, %v2170
      %2172 = vmatmul.bf16.gmra.mxu0 %v2135
      %v2173 = vpop.f32.mrf.mxu0
      %v2174 = vadd.f32 0.0, %v2173
      %v2175 = vpop.f32.mrf.mxu0
      %v2176 = vadd.f32 0.0, %v2175
      %2177 = vmatmul.bf16.gmra.mxu0 %v2138
      %v2178 = vpop.f32.mrf.mxu0
      %v2179 = vadd.f32 0.0, %v2178
      %v2180 = vpop.f32.mrf.mxu0
      %v2181 = vadd.f32 0.0, %v2180
      %2182 = vmatmul.bf16.gmra.mxu0 %v2141
      %v2183 = vpop.f32.mrf.mxu0
      %v2184 = vadd.f32 0.0, %v2183
      %v2185 = vpop.f32.mrf.mxu0
      %v2186 = vadd.f32 0.0, %v2185
      %2187 = vmatmul.bf16.gmra.mxu0 %v2144
      %v2188 = vpop.f32.mrf.mxu0
      %v2189 = vadd.f32 0.0, %v2188
      %v2190 = vpop.f32.mrf.mxu0
      %v2191 = vadd.f32 0.0, %v2190
      %2192 = vmatmul.bf16.gmra.mxu0 %v2147
      %v2193 = vpop.f32.mrf.mxu0
      %v2194 = vadd.f32 0.0, %v2193
      %v2195 = vpop.f32.mrf.mxu0
      %v2196 = vadd.f32 0.0, %v2195
      %2197 = vmatmul.bf16.gmra.mxu0 %v2150
      %v2198 = vpop.f32.mrf.mxu0
      %v2199 = vadd.f32 0.0, %v2198
      %v2200 = vpop.f32.mrf.mxu0
      %v2201 = vadd.f32 0.0, %v2200
      %2202 = vmatmul.bf16.gmra.mxu0 %v2153
      %v2203 = vpop.f32.mrf.mxu0
      %v2204 = vadd.f32 0.0, %v2203
      %v2205 = vpop.f32.mrf.mxu0
      %v2206 = vadd.f32 0.0, %v2205
      %2207 = vdwg.mxu0
      %v2208 = vpack.c.bf16 %v2171, %v2169
      %v2209 = vpack.c.bf16 %v2176, %v2174
      %v2210 = vpack.c.bf16 %v2181, %v2179
      %v2211 = vpack.c.bf16 %v2186, %v2184
      %v2212 = vpack.c.bf16 %v2191, %v2189
      %v2213 = vpack.c.bf16 %v2196, %v2194
      %v2214 = vpack.c.bf16 %v2201, %v2199
      %v2215 = vpack.c.bf16 %v2206, %v2204
      %v2216 = vld [vmem:[%s4] sm:$0xf]
      %v2217 = vld [vmem:[%s4 + $0x4] sm:$0xf]
      %v2218 = vld [vmem:[%s4 + $0x8] sm:$0x1]
      %v2222 = vunpack.c.l.b16 %v2216
      %v2223 = vunpack.c.l.b16 %v2217
      %v2224 = vunpack.c.l.b16 %v2218
      %v2225 = vpack.c.b16 %v2223, %v2222
      %v2226 = vpack.c.b16 %v2224, %v2224
      %vm2228 = vcmask 146432
      %v2230 = vsel %vm2228, %v2208, 0
      %v2233 = vsel %vm2228, %v2209, 0
      %v2236 = vsel %vm2228, %v2210, 0
      %v2239 = vsel %vm2228, %v2211, 0
      %v2242 = vsel %vm2228, %v2212, 0
      %v2245 = vsel %vm2228, %v2213, 0
      %v2248 = vsel %vm2228, %v2214, 0
      %v2251 = vsel %vm2228, %v2215, 0
      %vm2253 = vcmask 1040384
      %v2255 = vsel %vm2253, %v2226, 0
      %2257 = vmatpush.bf16.msra.mxu0 0
      %2258 = vmatpush.bf16.msra.mxu0 0
      %2259 = vmatpush.bf16.msra.mxu0 0
      %2260 = vmatpush.bf16.msra.mxu0 0
      %2261 = vmatpush.bf16.msra.mxu0 0
      %2262 = vmatpush.bf16.msra.mxu0 0
      %2263 = vmatpush.bf16.msra.mxu0 %v2255
      %2264 = vmatpush.bf16.msra.mxu0 %v2225
      %2265 = vmatmul.bf16.gmra.mxu0 %v2230
      %v2266 = vpop.f32.mrf.mxu0
      %v2267 = vadd.f32 0.0, %v2266
      %v2268 = vpop.f32.mrf.mxu0
      %v2269 = vadd.f32 0.0, %v2268
      %2270 = vmatmul.bf16.gmra.mxu0 %v2233
      %v2271 = vpop.f32.mrf.mxu0
      %v2272 = vadd.f32 0.0, %v2271
      %v2273 = vpop.f32.mrf.mxu0
      %v2274 = vadd.f32 0.0, %v2273
      %2275 = vmatmul.bf16.gmra.mxu0 %v2236
      %v2276 = vpop.f32.mrf.mxu0
      %v2277 = vadd.f32 0.0, %v2276
      %v2278 = vpop.f32.mrf.mxu0
      %v2279 = vadd.f32 0.0, %v2278
      %2280 = vmatmul.bf16.gmra.mxu0 %v2239
      %v2281 = vpop.f32.mrf.mxu0
      %v2282 = vadd.f32 0.0, %v2281
      %v2283 = vpop.f32.mrf.mxu0
      %v2284 = vadd.f32 0.0, %v2283
      %2285 = vmatmul.bf16.gmra.mxu0 %v2242
      %v2286 = vpop.f32.mrf.mxu0
      %v2287 = vadd.f32 0.0, %v2286
      %v2288 = vpop.f32.mrf.mxu0
      %v2289 = vadd.f32 0.0, %v2288
      %2290 = vmatmul.bf16.gmra.mxu0 %v2245
      %v2291 = vpop.f32.mrf.mxu0
      %v2292 = vadd.f32 0.0, %v2291
      %v2293 = vpop.f32.mrf.mxu0
      %v2294 = vadd.f32 0.0, %v2293
      %2295 = vmatmul.bf16.gmra.mxu0 %v2248
      %v2296 = vpop.f32.mrf.mxu0
      %v2297 = vadd.f32 0.0, %v2296
      %v2298 = vpop.f32.mrf.mxu0
      %v2299 = vadd.f32 0.0, %v2298
      %2300 = vmatmul.bf16.gmra.mxu0 %v2251
      %v2301 = vpop.f32.mrf.mxu0
      %v2302 = vadd.f32 0.0, %v2301
      %v2303 = vpop.f32.mrf.mxu0
      %v2304 = vadd.f32 0.0, %v2303
      %2305 = vdwg.mxu0
      %v2306 = vadd.f32 %v2267, 1.0
      %v2307 = vadd.f32 %v2269, 1.0
      %v2308 = vadd.f32 %v2272, 1.0
      %v2309 = vadd.f32 %v2274, 1.0
      %v2310 = vadd.f32 %v2277, 1.0
      %v2311 = vadd.f32 %v2279, 1.0
      %v2312 = vadd.f32 %v2282, 1.0
      %v2313 = vadd.f32 %v2284, 1.0
      %v2314 = vadd.f32 %v2287, 1.0
      %v2315 = vadd.f32 %v2289, 1.0
      %v2316 = vadd.f32 %v2292, 1.0
      %v2317 = vadd.f32 %v2294, 1.0
      %v2318 = vadd.f32 %v2297, 1.0
      %v2319 = vadd.f32 %v2299, 1.0
      %v2320 = vadd.f32 %v2302, 1.0
      %v2321 = vadd.f32 %v2304, 1.0
      %v2322 = vrcp.pop %v2306
      %v2323 = vrcp.pop %v2307
      %v2324 = vrcp.pop %v2308
      %v2325 = vrcp.pop %v2309
      %v2326 = vrcp.pop %v2310
      %v2327 = vrcp.pop %v2311
      %v2328 = vrcp.pop %v2312
      %v2329 = vrcp.pop %v2313
      %v2330 = vrcp.pop %v2314
      %v2331 = vrcp.pop %v2315
      %v2332 = vrcp.pop %v2316
      %v2333 = vrcp.pop %v2317
      %v2334 = vrcp.pop %v2318
      %v2335 = vrcp.pop %v2319
      %v2336 = vrcp.pop %v2320
      %v2337 = vrcp.pop %v2321
      %v2338 = vmul.f32 %v2267, %v2322
      %v2339 = vmul.f32 %v2269, %v2323
      %v2340 = vmul.f32 %v2272, %v2324
      %v2341 = vmul.f32 %v2274, %v2325
      %v2342 = vmul.f32 %v2277, %v2326
      %v2343 = vmul.f32 %v2279, %v2327
      %v2344 = vmul.f32 %v2282, %v2328
      %v2345 = vmul.f32 %v2284, %v2329
      %v2346 = vmul.f32 %v2287, %v2330
      %v2347 = vmul.f32 %v2289, %v2331
      %v2348 = vmul.f32 %v2292, %v2332
      %v2349 = vmul.f32 %v2294, %v2333
      %v2350 = vmul.f32 %v2297, %v2334
      %v2351 = vmul.f32 %v2299, %v2335
      %v2352 = vmul.f32 %v2302, %v2336
      %v2353 = vmul.f32 %v2304, %v2337
      %v2354 = vadd.f32 %v2267, 1e-16
      %v2355 = vadd.f32 %v2269, 1e-16
      %v2356 = vadd.f32 %v2272, 1e-16
      %v2357 = vadd.f32 %v2274, 1e-16
      %v2358 = vadd.f32 %v2277, 1e-16
      %v2359 = vadd.f32 %v2279, 1e-16
      %v2360 = vadd.f32 %v2282, 1e-16
      %v2361 = vadd.f32 %v2284, 1e-16
      %v2362 = vadd.f32 %v2287, 1e-16
      %v2363 = vadd.f32 %v2289, 1e-16
      %v2364 = vadd.f32 %v2292, 1e-16
      %v2365 = vadd.f32 %v2294, 1e-16
      %v2366 = vadd.f32 %v2297, 1e-16
      %v2367 = vadd.f32 %v2299, 1e-16
      %v2368 = vadd.f32 %v2302, 1e-16
      %v2369 = vadd.f32 %v2304, 1e-16
      %v2370 = vrsqrt.pop %v2354
      %v2371 = vmul.f32 %v2370, %v2354
      %v2372 = vmul.f32 %v2371, %v2370
      %v2373 = vmul.f32 0.5, %v2372
      %v2374 = vsub.f32 1.5, %v2373
      %v2375 = vmul.f32 %v2370, %v2374
      %vm2376 = vweird.f32 %v2354
      %vm2377 = vweird.f32 %v2370
      %vm2378 = vmor %vm2376, %vm2377
      %v2379 = vsel %vm2378, %v2370, %v2375
      %v2380 = vrsqrt.pop %v2355
      %v2381 = vmul.f32 %v2380, %v2355
      %v2382 = vmul.f32 %v2381, %v2380
      %v2383 = vmul.f32 0.5, %v2382
      %v2384 = vsub.f32 1.5, %v2383
      %v2385 = vmul.f32 %v2380, %v2384
      %vm2386 = vweird.f32 %v2355
      %vm2387 = vweird.f32 %v2380
      %vm2388 = vmor %vm2386, %vm2387
      %v2389 = vsel %vm2388, %v2380, %v2385
      %v2390 = vrsqrt.pop %v2356
      %v2391 = vmul.f32 %v2390, %v2356
      %v2392 = vmul.f32 %v2391, %v2390
      %v2393 = vmul.f32 0.5, %v2392
      %v2394 = vsub.f32 1.5, %v2393
      %v2395 = vmul.f32 %v2390, %v2394
      %vm2396 = vweird.f32 %v2356
      %vm2397 = vweird.f32 %v2390
      %vm2398 = vmor %vm2396, %vm2397
      %v2399 = vsel %vm2398, %v2390, %v2395
      %v2400 = vrsqrt.pop %v2357
      %v2401 = vmul.f32 %v2400, %v2357
      %v2402 = vmul.f32 %v2401, %v2400
      %v2403 = vmul.f32 0.5, %v2402
      %v2404 = vsub.f32 1.5, %v2403
      %v2405 = vmul.f32 %v2400, %v2404
      %vm2406 = vweird.f32 %v2357
      %vm2407 = vweird.f32 %v2400
      %vm2408 = vmor %vm2406, %vm2407
      %v2409 = vsel %vm2408, %v2400, %v2405
      %v2410 = vrsqrt.pop %v2358
      %v2411 = vmul.f32 %v2410, %v2358
      %v2412 = vmul.f32 %v2411, %v2410
      %v2413 = vmul.f32 0.5, %v2412
      %v2414 = vsub.f32 1.5, %v2413
      %v2415 = vmul.f32 %v2410, %v2414
      %vm2416 = vweird.f32 %v2358
      %vm2417 = vweird.f32 %v2410
      %vm2418 = vmor %vm2416, %vm2417
      %v2419 = vsel %vm2418, %v2410, %v2415
      %v2420 = vrsqrt.pop %v2359
      %v2421 = vmul.f32 %v2420, %v2359
      %v2422 = vmul.f32 %v2421, %v2420
      %v2423 = vmul.f32 0.5, %v2422
      %v2424 = vsub.f32 1.5, %v2423
      %v2425 = vmul.f32 %v2420, %v2424
      %vm2426 = vweird.f32 %v2359
      %vm2427 = vweird.f32 %v2420
      %vm2428 = vmor %vm2426, %vm2427
      %v2429 = vsel %vm2428, %v2420, %v2425
      %v2430 = vrsqrt.pop %v2360
      %v2431 = vmul.f32 %v2430, %v2360
      %v2432 = vmul.f32 %v2431, %v2430
      %v2433 = vmul.f32 0.5, %v2432
      %v2434 = vsub.f32 1.5, %v2433
      %v2435 = vmul.f32 %v2430, %v2434
      %vm2436 = vweird.f32 %v2360
      %vm2437 = vweird.f32 %v2430
      %vm2438 = vmor %vm2436, %vm2437
      %v2439 = vsel %vm2438, %v2430, %v2435
      %v2440 = vrsqrt.pop %v2361
      %v2441 = vmul.f32 %v2440, %v2361
      %v2442 = vmul.f32 %v2441, %v2440
      %v2443 = vmul.f32 0.5, %v2442
      %v2444 = vsub.f32 1.5, %v2443
      %v2445 = vmul.f32 %v2440, %v2444
      %vm2446 = vweird.f32 %v2361
      %vm2447 = vweird.f32 %v2440
      %vm2448 = vmor %vm2446, %vm2447
      %v2449 = vsel %vm2448, %v2440, %v2445
      %v2450 = vrsqrt.pop %v2362
      %v2451 = vmul.f32 %v2450, %v2362
      %v2452 = vmul.f32 %v2451, %v2450
      %v2453 = vmul.f32 0.5, %v2452
      %v2454 = vsub.f32 1.5, %v2453
      %v2455 = vmul.f32 %v2450, %v2454
      %vm2456 = vweird.f32 %v2362
      %vm2457 = vweird.f32 %v2450
      %vm2458 = vmor %vm2456, %vm2457
      %v2459 = vsel %vm2458, %v2450, %v2455
      %v2460 = vrsqrt.pop %v2363
      %v2461 = vmul.f32 %v2460, %v2363
      %v2462 = vmul.f32 %v2461, %v2460
      %v2463 = vmul.f32 0.5, %v2462
      %v2464 = vsub.f32 1.5, %v2463
      %v2465 = vmul.f32 %v2460, %v2464
      %vm2466 = vweird.f32 %v2363
      %vm2467 = vweird.f32 %v2460
      %vm2468 = vmor %vm2466, %vm2467
      %v2469 = vsel %vm2468, %v2460, %v2465
      %v2470 = vrsqrt.pop %v2364
      %v2471 = vmul.f32 %v2470, %v2364
      %v2472 = vmul.f32 %v2471, %v2470
      %v2473 = vmul.f32 0.5, %v2472
      %v2474 = vsub.f32 1.5, %v2473
      %v2475 = vmul.f32 %v2470, %v2474
      %vm2476 = vweird.f32 %v2364
      %vm2477 = vweird.f32 %v2470
      %vm2478 = vmor %vm2476, %vm2477
      %v2479 = vsel %vm2478, %v2470, %v2475
      %v2480 = vrsqrt.pop %v2365
      %v2481 = vmul.f32 %v2480, %v2365
      %v2482 = vmul.f32 %v2481, %v2480
      %v2483 = vmul.f32 0.5, %v2482
      %v2484 = vsub.f32 1.5, %v2483
      %v2485 = vmul.f32 %v2480, %v2484
      %vm2486 = vweird.f32 %v2365
      %vm2487 = vweird.f32 %v2480
      %vm2488 = vmor %vm2486, %vm2487
      %v2489 = vsel %vm2488, %v2480, %v2485
      %v2490 = vrsqrt.pop %v2366
      %v2491 = vmul.f32 %v2490, %v2366
      %v2492 = vmul.f32 %v2491, %v2490
      %v2493 = vmul.f32 0.5, %v2492
      %v2494 = vsub.f32 1.5, %v2493
      %v2495 = vmul.f32 %v2490, %v2494
      %vm2496 = vweird.f32 %v2366
      %vm2497 = vweird.f32 %v2490
      %vm2498 = vmor %vm2496, %vm2497
      %v2499 = vsel %vm2498, %v2490, %v2495
      %v2500 = vrsqrt.pop %v2367
      %v2501 = vmul.f32 %v2500, %v2367
      %v2502 = vmul.f32 %v2501, %v2500
      %v2503 = vmul.f32 0.5, %v2502
      %v2504 = vsub.f32 1.5, %v2503
      %v2505 = vmul.f32 %v2500, %v2504
      %vm2506 = vweird.f32 %v2367
      %vm2507 = vweird.f32 %v2500
      %vm2508 = vmor %vm2506, %vm2507
      %v2509 = vsel %vm2508, %v2500, %v2505
      %v2510 = vrsqrt.pop %v2368
      %v2511 = vmul.f32 %v2510, %v2368
      %v2512 = vmul.f32 %v2511, %v2510
      %v2513 = vmul.f32 0.5, %v2512
      %v2514 = vsub.f32 1.5, %v2513
      %v2515 = vmul.f32 %v2510, %v2514
      %vm2516 = vweird.f32 %v2368
      %vm2517 = vweird.f32 %v2510
      %vm2518 = vmor %vm2516, %vm2517
      %v2519 = vsel %vm2518, %v2510, %v2515
      %v2520 = vrsqrt.pop %v2369
      %v2521 = vmul.f32 %v2520, %v2369
      %v2522 = vmul.f32 %v2521, %v2520
      %v2523 = vmul.f32 0.5, %v2522
      %v2524 = vsub.f32 1.5, %v2523
      %v2525 = vmul.f32 %v2520, %v2524
      %vm2526 = vweird.f32 %v2369
      %vm2527 = vweird.f32 %v2520
      %vm2528 = vmor %vm2526, %vm2527
      %v2529 = vsel %vm2528, %v2520, %v2525
      %v2530 = vmul.f32 %v2338, %v2379
      %v2531 = vmul.f32 %v2339, %v2389
      %v2532 = vmul.f32 %v2340, %v2399
      %v2533 = vmul.f32 %v2341, %v2409
      %v2534 = vmul.f32 %v2342, %v2419
      %v2535 = vmul.f32 %v2343, %v2429
      %v2536 = vmul.f32 %v2344, %v2439
      %v2537 = vmul.f32 %v2345, %v2449
      %v2538 = vmul.f32 %v2346, %v2459
      %v2539 = vmul.f32 %v2347, %v2469
      %v2540 = vmul.f32 %v2348, %v2479
      %v2541 = vmul.f32 %v2349, %v2489
      %v2542 = vmul.f32 %v2350, %v2499
      %v2543 = vmul.f32 %v2351, %v2509
      %v2544 = vmul.f32 %v2352, %v2519
      %v2545 = vmul.f32 %v2353, %v2529
      %v2546 = vmul.f32 %v2031, %v2530
      %v2547 = vmul.f32 %v2033, %v2531
      %v2548 = vmul.f32 %v2036, %v2532
      %v2549 = vmul.f32 %v2038, %v2533
      %v2550 = vmul.f32 %v2041, %v2534
      %v2551 = vmul.f32 %v2043, %v2535
      %v2552 = vmul.f32 %v2046, %v2536
      %v2553 = vmul.f32 %v2048, %v2537
      %v2554 = vmul.f32 %v2051, %v2538
      %v2555 = vmul.f32 %v2053, %v2539
      %v2556 = vmul.f32 %v2056, %v2540
      %v2557 = vmul.f32 %v2058, %v2541
      %v2558 = vmul.f32 %v2061, %v2542
      %v2559 = vmul.f32 %v2063, %v2543
      %v2560 = vmul.f32 %v2066, %v2544
      %v2561 = vmul.f32 %v2068, %v2545
      %v2562 = vpack.c.bf16 %v2546, %v2546
      %v2563 = vpack.c.bf16 %v2547, %v2547
      %v2564 = vpack.c.bf16 %v2548, %v2548
      %v2565 = vpack.c.bf16 %v2549, %v2549
      %v2566 = vpack.c.bf16 %v2550, %v2550
      %v2567 = vpack.c.bf16 %v2551, %v2551
      %v2568 = vpack.c.bf16 %v2552, %v2552
      %v2569 = vpack.c.bf16 %v2553, %v2553
      %v2570 = vpack.c.bf16 %v2554, %v2554
      %v2571 = vpack.c.bf16 %v2555, %v2555
      %v2572 = vpack.c.bf16 %v2556, %v2556
      %v2573 = vpack.c.bf16 %v2557, %v2557
      %v2574 = vpack.c.bf16 %v2558, %v2558
      %v2575 = vpack.c.bf16 %v2559, %v2559
      %v2576 = vpack.c.bf16 %v2560, %v2560
      %v2577 = vpack.c.bf16 %v2561, %v2561
      %vm2578 = vcmask 584704
      %2579 = vst.msk [vmem:[%s224] sm:$0xf] %vm2578, %v2562
      %2580 = vst.msk [vmem:[%s224 + $0x4] sm:$0xf] %vm2578, %v2563
      %2581 = vst.msk [vmem:[%s224 + $0x8] sm:$0xf] %vm2578, %v2564
      %2582 = vst.msk [vmem:[%s224 + $0xc] sm:$0xf] %vm2578, %v2565
      %2583 = vst.msk [vmem:[%s224 + $0x10] sm:$0xf] %vm2578, %v2566
      %2584 = vst.msk [vmem:[%s224 + $0x14] sm:$0xf] %vm2578, %v2567
      %2585 = vst.msk [vmem:[%s224 + $0x18] sm:$0xf] %vm2578, %v2568
      %2586 = vst.msk [vmem:[%s224 + $0x1c] sm:$0xf] %vm2578, %v2569
      %2587 = vst.msk [vmem:[%s224 + $0x20] sm:$0xf] %vm2578, %v2570
      %2588 = vst.msk [vmem:[%s224 + $0x24] sm:$0xf] %vm2578, %v2571
      %2589 = vst.msk [vmem:[%s224 + $0x28] sm:$0xf] %vm2578, %v2572
      %2590 = vst.msk [vmem:[%s224 + $0x2c] sm:$0xf] %vm2578, %v2573
      %2591 = vst.msk [vmem:[%s224 + $0x30] sm:$0xf] %vm2578, %v2574
      %2592 = vst.msk [vmem:[%s224 + $0x34] sm:$0xf] %vm2578, %v2575
      %2593 = vst.msk [vmem:[%s224 + $0x38] sm:$0xf] %vm2578, %v2576
      %2594 = vst.msk [vmem:[%s224 + $0x3c] sm:$0xf] %vm2578, %v2577
      %p2595 = scmp.lt.s32.totalorder %s16, 2
      %s2596 = scalar_select %p2595, %s16, 2
      %s2597 = smul.addr %s2596, 16
      %s2598 = smul.addr %s2597, 4
      %s2599 = scalar_lea.vmem %s5, %s2598
      // Predicated region
      $region41: #{primary_capsule_forward.1} parent=39 // pred_check
        %p2600 = pneg %p144
      $region42: #{primary_capsule_forward.1} parent=39 // pred_check_branch
        %2602 = sbr.rel (%p2600) target = $region44
      $region43: #{primary_capsule_forward.1} parent=39 // pred_region
        _
      $region44: #{primary_capsule_forward.1} parent=39 // pred_fallthru
        _
    $region40: #{primary_capsule_forward.1} parent=5 // pred_fallthru
      _
    %p2603 = scmp.le.s32.totalorder 2, %s11
    // Predicated region
    $region45: #{primary_capsule_forward.1} parent=5 // pred_check
      %p2604 = pneg %p2603
    $region46: #{primary_capsule_forward.1} parent=5 // pred_check_branch
      %2606 = sbr.rel (%p2604) target = $region48
    $region47: #{primary_capsule_forward.1} parent=5 // pred_region
      %s2607 = ssub.s32 %s11, 2
      // Predicated region
      $region49: #{primary_capsule_forward.1} parent=47 // pred_check
        %p2608 = pneg %p150
      $region50: #{primary_capsule_forward.1} parent=47 // pred_check_branch
        %2610 = sbr.rel (%p2608) target = $region52
      $region51: #{primary_capsule_forward.1} parent=47 // pred_region
        %p2611 = scmp.lt.s32.totalorder %s17, 2
        %s2612 = scalar_select %p2611, %s17, 2
        %s2613 = smul.addr %s2612, 16
        %s2614 = smul.addr %s2613, 4
        %s2615 = scalar_lea.vmem %s5, %s2614
      $region52: #{primary_capsule_forward.1} parent=47 // pred_fallthru
        _
    $region48: #{primary_capsule_forward.1} parent=5 // pred_fallthru
      _
  $region6: #{primary_capsule_forward.1} parent=0 // loop_footer
    %s15 = sadd.s32 1, %s11
  $region7: #{primary_capsule_forward.1} parent=0 // loop_footer_branch
    %10 = sbr.rel target = $region3
  $region8: #{primary_capsule_forward.1} parent=0 // loop_exit
    _

</llo_original>
